<compile_context>
chip_gen: v6e
topology: v6e:2x2x1
jax: 0.10.0
libtpu: 0.0.40
codegen_flags: <defaults>
</compile_context>

<pallas_src>
import jax
import jax.numpy as jnp
from jax import lax
from jax.experimental import pallas as pl
from jax.experimental.pallas import tpu as pltpu


def _round_up(x, m):
    return ((x + m - 1) // m) * m


# ---------------------------------------------------------------------------
# Kernel 1: Conv3x3(pad=1) + BN(eval) + ReLU + MaxPool(2,2)  (one image / grid step)
# ---------------------------------------------------------------------------
def conv_block_kernel(xpad_ref, w_ref, scale_ref, bias_ref, out_ref):
    # xpad_ref : (1, H+2, W+2, Cin)  zero-padded NHWC input          (bf16)
    # w_ref    : (9*Cin, Cout)       taps flattened as (kh, kw, cin) (bf16)
    # scale_ref: (1, Cout)           gamma / sqrt(var + eps)         (f32)
    # bias_ref : (1, Cout)           beta + scale*(conv_bias - mean) (f32)
    # out_ref  : (1, Ho, Wo, Cout)   pooled output                   (f32)
    Ho, Wo, Cout = out_ref.shape[1], out_ref.shape[2], out_ref.shape[3]
    H, W = 2 * Ho, 2 * Wo                       # conv rows/cols that feed the pool (floor)
    x = xpad_ref[0]                             # (H+2, W+2, Cin)
    cin = x.shape[-1]

    # im2col: gather the 3x3 neighbourhood of every conv output pixel -> K = 9*Cin.
    taps = [x[kh:kh + H, kw:kw + W, :] for kh in range(3) for kw in range(3)]
    patches = jnp.concatenate(taps, axis=-1).reshape(H * W, 9 * cin)

    # Single MXU matmul: (H*W, 9*Cin) @ (9*Cin, Cout), f32 accumulation.
    acc = jnp.dot(patches, w_ref[...], preferred_element_type=jnp.float32)

    # BN(eval) folded to scale/bias + ReLU (applied pre-pool, like PyTorch).
    y = jnp.maximum(acc * scale_ref[...] + bias_ref[...], 0.0)        # (H*W, Cout)

    # 2x2 max-pool: pair-max over rows, then over columns (no strided/gather loads).
    y = jnp.max(y.reshape(Ho, 2, W, Cout), axis=1)                    # (Ho, W, Cout)
    y = jnp.max(y.reshape(Ho, Wo, 2, Cout), axis=2)                   # (Ho, Wo, Cout)
    out_ref[...] = y.reshape(1, Ho, Wo, Cout).astype(out_ref.dtype)


def conv_bn_relu_pool(x_nhwc, w_oihw, b_conv, gamma, beta, r_mean, r_var,
                      eps=1e-5, compute_dtype=jnp.bfloat16):
    B, H, W, Cin = x_nhwc.shape
    Cout = w_oihw.shape[0]
    Ho, Wo = H // 2, W // 2

    xpad = jnp.pad(x_nhwc, ((0, 0), (1, 1), (1, 1), (0, 0))).astype(compute_dtype)
    # (Cout, Cin, 3, 3) -> (3, 3, Cin, Cout) -> (9*Cin, Cout); K order = (kh, kw, cin).
    w9 = jnp.transpose(w_oihw, (2, 3, 1, 0)).reshape(9 * Cin, Cout).astype(compute_dtype)
    scale_v = (gamma / jnp.sqrt(r_var + eps)).astype(jnp.float32)
    bias_v = (beta + scale_v * (b_conv - r_mean)).astype(jnp.float32)

    # TODO(synk): for very long clips on v7x (64 MiB VMEM), tile the time axis with a halo
    # instead of DMAing the whole padded spectrogram per batch element.
    return pl.pallas_call(
        conv_block_kernel,
        out_shape=jax.ShapeDtypeStruct((B, Ho, Wo, Cout), jnp.float32),
        grid=(B,),
        in_specs=[
            pl.BlockSpec((1, H + 2, W + 2, Cin), lambda b: (b, 0, 0, 0)),
            pl.BlockSpec((9 * Cin, Cout), lambda b: (0, 0)),
            pl.BlockSpec((1, Cout), lambda b: (0, 0)),
            pl.BlockSpec((1, Cout), lambda b: (0, 0)),
        ],
        out_specs=pl.BlockSpec((1, Ho, Wo, Cout), lambda b: (b, 0, 0, 0)),
        compiler_params=pltpu.CompilerParams(
            dimension_semantics=("parallel",),
            vmem_limit_bytes=32 * 1024 * 1024),
    )(xpad, w9, scale_v.reshape(1, Cout), bias_v.reshape(1, Cout))


# ---------------------------------------------------------------------------
# Kernel 2: fc MLP  (Linear -> ReLU -> Dropout(eval) -> Linear -> ReLU), row-tiled
# ---------------------------------------------------------------------------
def mlp_kernel(x_ref, w1_ref, b1_ref, w2_ref, b2_ref, out_ref):
    # x_ref: (tile, conv_d) bf16; w1: (conv_d, hid) bf16; w2: (hid, d_fc) bf16
    # b1: (1, hid) f32; b2: (1, d_fc) f32; out: (tile, d_fc) f32
    h = jnp.dot(x_ref[...], w1_ref[...], preferred_element_type=jnp.float32) + b1_ref[...]
    h = jnp.maximum(h, 0.0)
    # TODO(synk): Dropout(p=0.3) implemented as eval-mode identity (no RNG masking).
    y = jnp.dot(h.astype(w2_ref.dtype), w2_ref[...],
                preferred_element_type=jnp.float32) + b2_ref[...]
    out_ref[...] = jnp.maximum(y, 0.0).astype(out_ref.dtype)


def mlp_fc(x2d, w1, b1, w2, b2, compute_dtype=jnp.bfloat16, max_tile=256):
    N, conv_d = x2d.shape
    hid = w1.shape[1]
    d_fc = w2.shape[1]
    tile = min(max_tile, _round_up(N, 8))
    N_pad = _round_up(N, tile)
    xp = jnp.pad(x2d, ((0, N_pad - N), (0, 0))).astype(compute_dtype)

    out = pl.pallas_call(
        mlp_kernel,
        out_shape=jax.ShapeDtypeStruct((N_pad, d_fc), jnp.float32),
        grid=(N_pad // tile,),
        in_specs=[
            pl.BlockSpec((tile, conv_d), lambda i: (i, 0)),
            pl.BlockSpec((conv_d, hid), lambda i: (0, 0)),   # weights stay resident
            pl.BlockSpec((1, hid), lambda i: (0, 0)),
            pl.BlockSpec((hid, d_fc), lambda i: (0, 0)),
            pl.BlockSpec((1, d_fc), lambda i: (0, 0)),
        ],
        out_specs=pl.BlockSpec((tile, d_fc), lambda i: (i, 0)),
        compiler_params=pltpu.CompilerParams(
            dimension_semantics=("parallel",),
            vmem_limit_bytes=32 * 1024 * 1024),
    )(xp, w1.astype(compute_dtype), b1.reshape(1, hid).astype(jnp.float32),
      w2.astype(compute_dtype), b2.reshape(1, d_fc).astype(jnp.float32))
    return out[:N]


# ---------------------------------------------------------------------------
# Full encoder forward (stack=True)
# ---------------------------------------------------------------------------
def audio_ntt_encoder(x_nchw, params, stack=True):
    # x_nchw: (B, 1, n_mels, T)
    y = jnp.transpose(x_nchw, (0, 2, 3, 1))   # NHWC: (B, F, T, 1)
    for lp in params["conv_blocks"]:
        y = conv_bn_relu_pool(y, lp["w"], lp["b"], lp["gamma"], lp["beta"],
                              lp["mean"], lp["var"])
    B, Fp, Tp, C = y.shape
    # PyTorch: permute(0,3,2,1) then reshape(B, T, C*D)  -> freq-major, channel-minor.
    feats = jnp.transpose(y, (0, 2, 1, 3)).reshape(B, Tp, Fp * C)   # (B, T, conv_d), f32
    conv_d = Fp * C
    fc = mlp_fc(feats.reshape(B * Tp, conv_d),
                params["w1"], params["b1"], params["w2"], params["b2"])
    fc = fc.reshape(B, Tp, -1)
    # Passthrough concat done in XLA (no HBM round-trip of feats through the kernel).
    return jnp.concatenate([feats, fc], axis=-1) if stack else fc


# ---------------------------------------------------------------------------
# Pure-JAX reference (mirrors the PyTorch forward, eval mode).
# matmul_dtype=bf16 reproduces the kernel's operand precision (f32 accumulation);
# matmul_dtype=f32 is the exact PyTorch-equivalent reference.
# ---------------------------------------------------------------------------
def reference_forward(x_nchw, params, eps=1e-5, matmul_dtype=jnp.float32):
    y = x_nchw
    for lp in params["conv_blocks"]:
        y = lax.conv_general_dilated(
            y.astype(matmul_dtype), lp["w"].astype(matmul_dtype), (1, 1), ((1, 1), (1, 1)),
            dimension_numbers=("NCHW", "OIHW", "NCHW"),
            preferred_element_type=jnp.float32)
        y = y + lp["b"][None, :, None, None]
        y = (y - lp["mean"][None, :, None, None]) / jnp.sqrt(
            lp["var"][None, :, None, None] + eps) * lp["gamma"][None, :, None, None] \
            + lp["beta"][None, :, None, None]
        y = jnp.maximum(y, 0.0)
        B, C, H, W = y.shape
        y = y.reshape(B, C, H // 2, 2, W // 2, 2).max(axis=(3, 5))
    x = jnp.transpose(y, (0, 3, 2, 1))         # (B, T, D, C)
    B, T, D, C = x.shape
    x = x.reshape(B, T, C * D)
    h = jnp.maximum(
        jnp.dot(x.astype(matmul_dtype), params["w1"].astype(matmul_dtype),
                preferred_element_type=jnp.float32) + params["b1"], 0.0)
    x_fc = jnp.maximum(
        jnp.dot(h.astype(matmul_dtype), params["w2"].astype(matmul_dtype),
                preferred_element_type=jnp.float32) + params["b2"], 0.0)
    return jnp.concatenate([x, x_fc], axis=-1)


# ---------------------------------------------------------------------------
# Deterministic parameter init + driver
# ---------------------------------------------------------------------------
def make_params(key, n_mels, d, base_d, mlp_hidden_d, conv_layers):
    conv_d = base_d * (n_mels // 2 ** conv_layers)
    keys = iter(jax.random.split(key, 8 * conv_layers + 8))
    nrm = lambda k, s, sc=0.1: sc * jax.random.normal(k, s, jnp.float32)
    blocks = []
    cin = 1
    for _ in range(conv_layers):
        blocks.append(dict(
            w=nrm(next(keys), (base_d, cin, 3, 3)),
            b=nrm(next(keys), (base_d,)),
            gamma=1.0 + nrm(next(keys), (base_d,)),
            beta=nrm(next(keys), (base_d,)),
            mean=nrm(next(keys), (base_d,)),
            var=0.5 + jax.random.uniform(next(keys), (base_d,), jnp.float32),
        ))
        cin = base_d
    return dict(
        conv_blocks=blocks,
        w1=nrm(next(keys), (conv_d, mlp_hidden_d)),
        b1=nrm(next(keys), (mlp_hidden_d,)),
        w2=nrm(next(keys), (mlp_hidden_d, d - conv_d)),
        b2=nrm(next(keys), (d - conv_d,)),
    )


if __name__ == "__main__":
    # Small config: n_mels=16, T=16, base_d=8, mlp_hidden_d=32, d=64, conv_layers=2
    n_mels, T, base_d, mlp_hidden_d, d, conv_layers = 16, 16, 8, 32, 64, 2
    B = 2
    key = jax.random.PRNGKey(0)
    k_par, k_in = jax.random.split(key)
    params = make_params(k_par, n_mels, d, base_d, mlp_hidden_d, conv_layers)
    x = jax.random.normal(k_in, (B, 1, n_mels, T), jnp.float32)

    out = audio_ntt_encoder(x, params, stack=True)
    out = jax.block_until_ready(out)
    assert out.shape == (B, T // 2 ** conv_layers, d), out.shape

    # Structural check: reference run with the same bf16 operand precision -> tight match.
    ref_bf16 = reference_forward(x, params, matmul_dtype=jnp.bfloat16)
    err_struct = float(jnp.max(jnp.abs(out - ref_bf16)))
    assert err_struct < 1e-2, f"mismatch vs bf16-operand reference: {err_struct}"

    # Precision sanity check against the exact f32 PyTorch-equivalent reference.
    ref_f32 = reference_forward(x, params, matmul_dtype=jnp.float32)
    err_f32 = float(jnp.max(jnp.abs(out - ref_f32)))
    assert err_f32 < 5e-2, f"mismatch vs f32 reference: {err_f32}"

    print("KERNEL_OK")
</pallas_src>

<mosaic_0001>
module attributes {stable_mosaic.version = 11 : i64} {
  func.func @conv_block_kernel(%arg0: i32, %arg1: memref<1x18x18x1xbf16, #tpu.memory_space<vmem>>, %arg2: memref<9x8xbf16, #tpu.memory_space<vmem>>, %arg3: memref<1x8xf32, #tpu.memory_space<vmem>>, %arg4: memref<1x8xf32, #tpu.memory_space<vmem>>, %arg5: memref<1x8x8x8xf32, #tpu.memory_space<vmem>>) attributes {dimension_semantics = [#tpu.dimension_semantics<parallel>], iteration_bounds = array<i64: 2>, scalar_prefetch = 0 : i64, scratch_operands = 0 : i64, tpu.core_type = #tpu.core_type<tc>, window_params = [{transform_indices = @transform_0, window_bounds = array<i64: 1, 18, 18, 1>}, {pipeline_mode = #tpu.pipeline_mode<synchronous>, transform_indices = @transform_1, window_bounds = array<i64: 9, 8>}, {pipeline_mode = #tpu.pipeline_mode<synchronous>, transform_indices = @transform_2, window_bounds = array<i64: 1, 8>}, {pipeline_mode = #tpu.pipeline_mode<synchronous>, transform_indices = @transform_3, window_bounds = array<i64: 1, 8>}, {transform_indices = @transform_4, window_bounds = array<i64: 1, 8, 8, 8>}]} {
    %c0 = arith.constant 0 : index
    %c0_0 = arith.constant 0 : index
    %c0_1 = arith.constant 0 : index
    %c0_2 = arith.constant 0 : index
    %0 = vector.load %arg1[%c0, %c0_0, %c0_1, %c0_2] : memref<1x18x18x1xbf16, #tpu.memory_space<vmem>>, vector<1x18x18x1xbf16>
    %1 = vector.shape_cast %0 : vector<1x18x18x1xbf16> to vector<18x18x1xbf16>
    %2 = vector.extract_strided_slice %1 {offsets = [0, 0, 0], sizes = [16, 16, 1], strides = [1, 1, 1]} : vector<18x18x1xbf16> to vector<16x16x1xbf16>
    %3 = vector.extract_strided_slice %1 {offsets = [0, 1, 0], sizes = [16, 16, 1], strides = [1, 1, 1]} : vector<18x18x1xbf16> to vector<16x16x1xbf16>
    %4 = vector.extract_strided_slice %1 {offsets = [0, 2, 0], sizes = [16, 16, 1], strides = [1, 1, 1]} : vector<18x18x1xbf16> to vector<16x16x1xbf16>
    %5 = vector.extract_strided_slice %1 {offsets = [1, 0, 0], sizes = [16, 16, 1], strides = [1, 1, 1]} : vector<18x18x1xbf16> to vector<16x16x1xbf16>
    %6 = vector.extract_strided_slice %1 {offsets = [1, 1, 0], sizes = [16, 16, 1], strides = [1, 1, 1]} : vector<18x18x1xbf16> to vector<16x16x1xbf16>
    %7 = vector.extract_strided_slice %1 {offsets = [1, 2, 0], sizes = [16, 16, 1], strides = [1, 1, 1]} : vector<18x18x1xbf16> to vector<16x16x1xbf16>
    %8 = vector.extract_strided_slice %1 {offsets = [2, 0, 0], sizes = [16, 16, 1], strides = [1, 1, 1]} : vector<18x18x1xbf16> to vector<16x16x1xbf16>
    %9 = vector.extract_strided_slice %1 {offsets = [2, 1, 0], sizes = [16, 16, 1], strides = [1, 1, 1]} : vector<18x18x1xbf16> to vector<16x16x1xbf16>
    %10 = vector.extract_strided_slice %1 {offsets = [2, 2, 0], sizes = [16, 16, 1], strides = [1, 1, 1]} : vector<18x18x1xbf16> to vector<16x16x1xbf16>
    %11 = tpu.concatenate %2, %3, %4, %5, %6, %7, %8, %9, %10 in 2 : vector<16x16x1xbf16>, vector<16x16x1xbf16>, vector<16x16x1xbf16>, vector<16x16x1xbf16>, vector<16x16x1xbf16>, vector<16x16x1xbf16>, vector<16x16x1xbf16>, vector<16x16x1xbf16>, vector<16x16x1xbf16> -> vector<16x16x9xbf16>
    %12 = vector.shape_cast %11 : vector<16x16x9xbf16> to vector<256x9xbf16>
    %c0_3 = arith.constant 0 : index
    %c0_4 = arith.constant 0 : index
    %13 = vector.load %arg2[%c0_3, %c0_4] : memref<9x8xbf16, #tpu.memory_space<vmem>>, vector<9x8xbf16>
    %cst = arith.constant dense<0.000000e+00> : vector<256x8xf32>
    %14 = tpu.matmul %12, %13, %cst {dimension_numbers = #tpu.dot_dimension_numbers<[1], [0], [0], [1], [0, 0, 1, 1], [], []>} : vector<256x9xbf16>, vector<9x8xbf16>, vector<256x8xf32> -> vector<256x8xf32>
    %c0_5 = arith.constant 0 : index
    %c0_6 = arith.constant 0 : index
    %15 = vector.load %arg3[%c0_5, %c0_6] : memref<1x8xf32, #tpu.memory_space<vmem>>, vector<1x8xf32>
    %16 = vector.broadcast %15 : vector<1x8xf32> to vector<256x8xf32>
    %17 = arith.mulf %14, %16 : vector<256x8xf32>
    %c0_7 = arith.constant 0 : index
    %c0_8 = arith.constant 0 : index
    %18 = vector.load %arg4[%c0_7, %c0_8] : memref<1x8xf32, #tpu.memory_space<vmem>>, vector<1x8xf32>
    %19 = vector.broadcast %18 : vector<1x8xf32> to vector<256x8xf32>
    %20 = arith.addf %17, %19 : vector<256x8xf32>
    %cst_9 = arith.constant 0.000000e+00 : f32
    %21 = vector.broadcast %cst_9 : f32 to vector<256x8xf32>
    %22 = arith.maximumf %20, %21 : vector<256x8xf32>
    %23 = vector.shape_cast %22 : vector<256x8xf32> to vector<8x2x16x8xf32>
    %cst_10 = arith.constant dense<0xFF800000> : vector<8x16x8xf32>
    %24 = vector.multi_reduction <maximumf>, %23, %cst_10 [1] : vector<8x2x16x8xf32> to vector<8x16x8xf32>
    %25 = vector.shape_cast %24 : vector<8x16x8xf32> to vector<8x8x2x8xf32>
    %cst_11 = arith.constant dense<0xFF800000> : vector<8x8x8xf32>
    %26 = vector.multi_reduction <maximumf>, %25, %cst_11 [2] : vector<8x8x2x8xf32> to vector<8x8x8xf32>
    %27 = vector.shape_cast %26 : vector<8x8x8xf32> to vector<1x8x8x8xf32>
    %c0_12 = arith.constant 0 : index
    %c0_13 = arith.constant 0 : index
    %c0_14 = arith.constant 0 : index
    %c0_15 = arith.constant 0 : index
    %28 = vector.load %arg5[%c0_12, %c0_13, %c0_14, %c0_15] : memref<1x8x8x8xf32, #tpu.memory_space<vmem>>, vector<1x8x8x8xf32>
    tpu.vector_store %arg5[%c0_12, %c0_13, %c0_14, %c0_15], %27 {strides = array<i32>} : memref<1x8x8x8xf32, #tpu.memory_space<vmem>>, vector<1x8x8x8xf32>,
    return
  }
  func.func @transform_0(%arg0: i32) -> (i32, i32, i32, i32) {
    %c0_i32 = arith.constant 0 : i32
    %c0_i32_0 = arith.constant 0 : i32
    %c0_i32_1 = arith.constant 0 : i32
    %c0_i32_2 = arith.constant 0 : i32
    return %arg0, %c0_i32, %c0_i32_0, %c0_i32_1 : i32, i32, i32, i32
  }
  func.func @transform_1(%arg0: i32) -> (i32, i32) {
    %c0_i32 = arith.constant 0 : i32
    %c0_i32_0 = arith.constant 0 : i32
    %c0_i32_1 = arith.constant 0 : i32
    return %c0_i32, %c0_i32_0 : i32, i32
  }
  func.func @transform_2(%arg0: i32) -> (i32, i32) {
    %c0_i32 = arith.constant 0 : i32
    %c0_i32_0 = arith.constant 0 : i32
    %c0_i32_1 = arith.constant 0 : i32
    return %c0_i32, %c0_i32_0 : i32, i32
  }
  func.func @transform_3(%arg0: i32) -> (i32, i32) {
    %c0_i32 = arith.constant 0 : i32
    %c0_i32_0 = arith.constant 0 : i32
    %c0_i32_1 = arith.constant 0 : i32
    return %c0_i32, %c0_i32_0 : i32, i32
  }
  func.func @transform_4(%arg0: i32) -> (i32, i32, i32, i32) {
    %c0_i32 = arith.constant 0 : i32
    %c0_i32_0 = arith.constant 0 : i32
    %c0_i32_1 = arith.constant 0 : i32
    %c0_i32_2 = arith.constant 0 : i32
    return %arg0, %c0_i32, %c0_i32_0, %c0_i32_1 : i32, i32, i32, i32
  }
}

</mosaic_0001>

<llo_original>
// kernel: tpu_custom_call.1
$region0: #{tpu_custom_call.1}
  #allocation0 [shape = 'u32[]', space=smem, size = 0x4, offset = 0x4, fixed_abs, tag = 'smem constant byte address 0x4 - core index']
  #allocation1 [shape = 'u32[144,128]{1,0:T(1,128)}', space=vmem, size = 0x12000, scoped, tag = 'internal scratch']
  %s0 = inlined_call_operand.vmem [shape: bf16[2,18,18,1], index: 0, kind: input, shape index: {}]
  %s1 = inlined_call_operand.vmem [shape: bf16[9,8], index: 1, kind: input, shape index: {}]
  %s2 = inlined_call_operand.vmem [shape: f32[1,8], index: 2, kind: input, shape index: {}]
  %s3 = inlined_call_operand.vmem [shape: f32[1,8], index: 3, kind: input, shape index: {}]
  %s4 = inlined_call_operand.hbm [shape: f32[2,8,8,8], index: 4, kind: output, shape index: {}]
  %s5 = sld [smem:[#allocation0]]
  $region49: #{tpu_custom_call.1} parent=0
    _
  %s7 = ssub.s32 1, %s5
  %s8 = scalar_select 0, %s7, %s5
  $region1: #{tpu_custom_call.1} parent=0
    #allocation2 [shape = 'u8[65536]{0}', space=vmem, size = 0x10000, scoped, tag = 'output window, operand 0']
    #allocation3 [shape = 's32[2]{0}', space=sflag, size = 0x8, scoped, tag = 'scoped memory for tpu_custom_call.1']
    %9 = vsyncpa [#allocation3], 0
    %s10 = scalar_lea.sflag [#allocation3], 1
    %11 = vsyncpa %s10, 0
    loop: start=0, step=1, limit=4
    $region2: #{tpu_custom_call.1} parent=1 // loop_pre_header
      _
    $region3: #{tpu_custom_call.1} parent=1 // loop_header
      %s13 = sphi 0, %s17
      %p14 = scmp.ge.s32.totalorder %s13, 4
      %s23 = sphi 0, %s25
      %s26 = sphi 0, %s23
      %s27 = sphi 0, %s26
      %s43 = sphi 0, %s27
      %s47 = sphi 0, %s47
      %s49 = sphi 0, %s47
      %s50 = sphi 0, %s49
      %s64 = sphi 0, %s50
      %s68 = sphi 0, %s68
      %s70 = sphi 0, %s68
      %s71 = sphi 0, %s70
      %s85 = sphi 0, %s71
      %s89 = sphi 0, %s89
      %s91 = sphi 0, %s89
      %s92 = sphi 0, %s91
      %s106 = sphi 0, %s92
      %s112 = sphi 0, %s114
      %s115 = sphi 0, %s112
      %s116 = sphi 0, %s115
      %s132 = sphi 0, %s116
    $region4: #{tpu_custom_call.1} parent=1 // loop_header_branch
      %16 = sbr.rel (%p14) target = $region8
    $region5: #{tpu_custom_call.1} parent=1 // loop_body
      %s18 = ssub.s32 %s13, 1
      %s19 = ssub.s32 %s13, 2
      %s20 = sadd.s32 %s13, 1
      %s21 = ssub.s32 %s13, %s20
      %p22 = scmp.eq.s32.totalorder %s21, 0
      %s24 = sadd.s32 %s23, 1
      %s25 = scalar_select %p22, %s23, %s24
      %p28 = pneg %p22
      %p29 = scmp.eq.s32.totalorder %s13, 1
      %p30 = por %p28, %p29
      %p31 = scmp.ne.s32.totalorder %s23, %s26
      %p32 = scmp.eq.s32.totalorder %s13, 0
      %p33 = por %p31, %p32
      %p34 = scmp.ne.s32.totalorder %s23, %s26
      %p35 = scmp.eq.s32.totalorder %s18, 1
      %p36 = por %p34, %p35
      %p37 = scmp.ne.s32.totalorder %s26, %s27
      %p38 = scmp.eq.s32.totalorder %s18, 0
      %p39 = por %p37, %p38
      %p40 = scmp.ne.s32.totalorder %s26, %s27
      %p41 = scmp.eq.s32.totalorder %s19, 1
      %p42 = por %p40, %p41
      %p44 = scmp.ne.s32.totalorder %s27, %s43
      %p45 = scmp.eq.s32.totalorder %s19, 0
      %p46 = por %p44, %p45
      %s48 = sadd.s32 %s47, 1
      %p51 = scmp.eq.s32.totalorder %s13, 1
      %p52 = scmp.ne.s32.totalorder %s47, %s49
      %p53 = scmp.eq.s32.totalorder %s13, 0
      %p54 = por %p52, %p53
      %p55 = scmp.ne.s32.totalorder %s47, %s49
      %p56 = scmp.eq.s32.totalorder %s18, 1
      %p57 = por %p55, %p56
      %p58 = scmp.ne.s32.totalorder %s49, %s50
      %p59 = scmp.eq.s32.totalorder %s18, 0
      %p60 = por %p58, %p59
      %p61 = scmp.ne.s32.totalorder %s49, %s50
      %p62 = scmp.eq.s32.totalorder %s19, 1
      %p63 = por %p61, %p62
      %p65 = scmp.ne.s32.totalorder %s50, %s64
      %p66 = scmp.eq.s32.totalorder %s19, 0
      %p67 = por %p65, %p66
      %s69 = sadd.s32 %s68, 1
      %p72 = scmp.eq.s32.totalorder %s13, 1
      %p73 = scmp.ne.s32.totalorder %s68, %s70
      %p74 = scmp.eq.s32.totalorder %s13, 0
      %p75 = por %p73, %p74
      %p76 = scmp.ne.s32.totalorder %s68, %s70
      %p77 = scmp.eq.s32.totalorder %s18, 1
      %p78 = por %p76, %p77
      %p79 = scmp.ne.s32.totalorder %s70, %s71
      %p80 = scmp.eq.s32.totalorder %s18, 0
      %p81 = por %p79, %p80
      %p82 = scmp.ne.s32.totalorder %s70, %s71
      %p83 = scmp.eq.s32.totalorder %s19, 1
      %p84 = por %p82, %p83
      %p86 = scmp.ne.s32.totalorder %s71, %s85
      %p87 = scmp.eq.s32.totalorder %s19, 0
      %p88 = por %p86, %p87
      %s90 = sadd.s32 %s89, 1
      %p93 = scmp.eq.s32.totalorder %s13, 1
      %p94 = scmp.ne.s32.totalorder %s89, %s91
      %p95 = scmp.eq.s32.totalorder %s13, 0
      %p96 = por %p94, %p95
      %p97 = scmp.ne.s32.totalorder %s89, %s91
      %p98 = scmp.eq.s32.totalorder %s18, 1
      %p99 = por %p97, %p98
      %p100 = scmp.ne.s32.totalorder %s91, %s92
      %p101 = scmp.eq.s32.totalorder %s18, 0
      %p102 = por %p100, %p101
      %p103 = scmp.ne.s32.totalorder %s91, %s92
      %p104 = scmp.eq.s32.totalorder %s19, 1
      %p105 = por %p103, %p104
      %p107 = scmp.ne.s32.totalorder %s92, %s106
      %p108 = scmp.eq.s32.totalorder %s19, 0
      %p109 = por %p107, %p108
      %s110 = ssub.s32 %s13, %s20
      %p111 = scmp.eq.s32.totalorder %s110, 0
      %s113 = sadd.s32 %s112, 1
      %s114 = scalar_select %p111, %s112, %s113
      %p117 = pneg %p111
      %p118 = scmp.eq.s32.totalorder %s13, 1
      %p119 = por %p117, %p118
      %p120 = scmp.ne.s32.totalorder %s112, %s115
      %p121 = scmp.eq.s32.totalorder %s13, 0
      %p122 = por %p120, %p121
      %p123 = scmp.ne.s32.totalorder %s112, %s115
      %p124 = scmp.eq.s32.totalorder %s18, 1
      %p125 = por %p123, %p124
      %p126 = scmp.ne.s32.totalorder %s115, %s116
      %p127 = scmp.eq.s32.totalorder %s18, 0
      %p128 = por %p126, %p127
      %p129 = scmp.ne.s32.totalorder %s115, %s116
      %p130 = scmp.eq.s32.totalorder %s19, 1
      %p131 = por %p129, %p130
      %p133 = scmp.ne.s32.totalorder %s116, %s132
      %p134 = scmp.eq.s32.totalorder %s19, 0
      %p135 = por %p133, %p134
      %p136 = scmp.le.s32.totalorder 1, %s13
      %p137 = scmp.lt.s32.totalorder %s13, 3
      %p138 = pnand %p136, %p137
      %p139 = pneg %p138
      // Predicated region
      $region9: #{tpu_custom_call.1} parent=5 // pred_check
        _
      $region10: #{tpu_custom_call.1} parent=5 // pred_check_branch
        %141 = sbr.rel (%p138) target = $region12
      $region11: #{tpu_custom_call.1} parent=5 // pred_region
        %s142 = ssub.s32 %s13, 1
        // Predicated region
        $region13: #{tpu_custom_call.1} parent=11 // pred_check
          %p143 = pneg %p60
        $region14: #{tpu_custom_call.1} parent=11 // pred_check_branch
          %145 = sbr.rel (%p143) target = $region16
        $region15: #{tpu_custom_call.1} parent=11 // pred_region
          _
        $region16: #{tpu_custom_call.1} parent=11 // pred_fallthru
          _
        // Predicated region
        $region17: #{tpu_custom_call.1} parent=11 // pred_check
          %p146 = pneg %p81
        $region18: #{tpu_custom_call.1} parent=11 // pred_check_branch
          %148 = sbr.rel (%p146) target = $region20
        $region19: #{tpu_custom_call.1} parent=11 // pred_region
          _
        $region20: #{tpu_custom_call.1} parent=11 // pred_fallthru
          _
        // Predicated region
        $region21: #{tpu_custom_call.1} parent=11 // pred_check
          %p149 = pneg %p102
        $region22: #{tpu_custom_call.1} parent=11 // pred_check_branch
          %151 = sbr.rel (%p149) target = $region24
        $region23: #{tpu_custom_call.1} parent=11 // pred_region
          _
        $region24: #{tpu_custom_call.1} parent=11 // pred_fallthru
          _
      $region12: #{tpu_custom_call.1} parent=5 // pred_fallthru
        _
      %p152 = scmp.lt.s32.totalorder %s13, 2
      // Predicated region
      $region25: #{tpu_custom_call.1} parent=5 // pred_check
        %p153 = pneg %p152
      $region26: #{tpu_custom_call.1} parent=5 // pred_check_branch
        %155 = sbr.rel (%p153) target = $region28
      $region27: #{tpu_custom_call.1} parent=5 // pred_region
        // Predicated region
        $region29: #{tpu_custom_call.1} parent=27 // pred_check
          %p156 = pneg %p33
        $region30: #{tpu_custom_call.1} parent=27 // pred_check_branch
          %158 = sbr.rel (%p156) target = $region32
        $region31: #{tpu_custom_call.1} parent=27 // pred_region
          %p159 = scmp.lt.s32.totalorder %s13, 1
          %s160 = scalar_select %p159, %s13, 1
          %s161 = smul.addr %s160, 54
          %s162 = smul.addr %s161, 4
          %s163 = scalar_lea.vmem %s0, %s162
        $region32: #{tpu_custom_call.1} parent=27 // pred_fallthru
          _
      $region28: #{tpu_custom_call.1} parent=5 // pred_fallthru
        _
      %p164 = scmp.le.s32.totalorder 1, %s13
      %p165 = scmp.lt.s32.totalorder %s13, 3
      %p166 = pnand %p164, %p165
      %p167 = pneg %p166
      // Predicated region
      $region33: #{tpu_custom_call.1} parent=5 // pred_check
        _
      $region34: #{tpu_custom_call.1} parent=5 // pred_check_branch
        %169 = sbr.rel (%p166) target = $region36
      $region35: #{tpu_custom_call.1} parent=5 // pred_region
        %s170 = ssub.s32 %s13, 1
        %p171 = scmp.lt.s32.totalorder %s18, 1
        %s172 = scalar_select %p171, %s18, 1
        %s173 = smul.addr %s172, 54
        %s174 = smul.addr %s173, 4
        %s175 = scalar_lea.vmem %s0, %s174
        %p176 = pneg %p39
        %p177 = pneg %p36
        %p178 = pneg %p60
        %p179 = pneg %p57
        %p180 = pneg %p81
        %p181 = pneg %p78
        %p182 = pneg %p102
        %p183 = pneg %p99
        %p184 = pneg %p128
        %p185 = pneg %p125
        %s186 = sand.u32 %s115, 1
        %s187 = scalar_lea.sflag [#allocation3], %s186
        %s188 = sand.u32 %s115, 1
        %s189 = smul.addr %s188, 64
        %s190 = scalar_lea.vmem [#allocation2], %s189
        %p191 = scmp.lt.s32.totalorder %s18, 1
        %s192 = scalar_select %p191, %s18, 1
        %s193 = smul.addr %s192, 54
        %s194 = smul.addr %s193, 4
        %s195 = scalar_lea.vmem %s0, %s194
        %v197 = vld [vmem:[%s195] sm:$0xf]
        %v198 = vld [vmem:[%s195 + $0x4] sm:$0xf]
        %v199 = vld [vmem:[%s195 + $0x8] sm:$0x1]
        %v200 = vld [vmem:[%s195 + $0xc] sm:$0xf]
        %v201 = vld [vmem:[%s195 + $0x10] sm:$0xf]
        %v202 = vld [vmem:[%s195 + $0x14] sm:$0x1]
        %v203 = vld [vmem:[%s195 + $0x18] sm:$0xf]
        %v204 = vld [vmem:[%s195 + $0x1c] sm:$0xf]
        %v205 = vld [vmem:[%s195 + $0x20] sm:$0x1]
        %v206 = vld [vmem:[%s195 + $0x24] sm:$0xf]
        %v207 = vld [vmem:[%s195 + $0x28] sm:$0xf]
        %v208 = vld [vmem:[%s195 + $0x2c] sm:$0x1]
        %v209 = vld [vmem:[%s195 + $0x30] sm:$0xf]
        %v210 = vld [vmem:[%s195 + $0x34] sm:$0xf]
        %v211 = vld [vmem:[%s195 + $0x38] sm:$0x1]
        %v212 = vld [vmem:[%s195 + $0x3c] sm:$0xf]
        %v213 = vld [vmem:[%s195 + $0x40] sm:$0xf]
        %v214 = vld [vmem:[%s195 + $0x44] sm:$0x1]
        %v215 = vld [vmem:[%s195 + $0x48] sm:$0xf]
        %v216 = vld [vmem:[%s195 + $0x4c] sm:$0xf]
        %v217 = vld [vmem:[%s195 + $0x50] sm:$0x1]
        %v218 = vld [vmem:[%s195 + $0x54] sm:$0xf]
        %v219 = vld [vmem:[%s195 + $0x58] sm:$0xf]
        %v220 = vld [vmem:[%s195 + $0x5c] sm:$0x1]
        %v221 = vld [vmem:[%s195 + $0x60] sm:$0xf]
        %v222 = vld [vmem:[%s195 + $0x64] sm:$0xf]
        %v223 = vld [vmem:[%s195 + $0x68] sm:$0x1]
        %v224 = vld [vmem:[%s195 + $0x6c] sm:$0xf]
        %v225 = vld [vmem:[%s195 + $0x70] sm:$0xf]
        %v226 = vld [vmem:[%s195 + $0x74] sm:$0x1]
        %v227 = vld [vmem:[%s195 + $0x78] sm:$0xf]
        %v228 = vld [vmem:[%s195 + $0x7c] sm:$0xf]
        %v229 = vld [vmem:[%s195 + $0x80] sm:$0x1]
        %v230 = vld [vmem:[%s195 + $0x84] sm:$0xf]
        %v231 = vld [vmem:[%s195 + $0x88] sm:$0xf]
        %v232 = vld [vmem:[%s195 + $0x8c] sm:$0x1]
        %v233 = vld [vmem:[%s195 + $0x90] sm:$0xf]
        %v234 = vld [vmem:[%s195 + $0x94] sm:$0xf]
        %v235 = vld [vmem:[%s195 + $0x98] sm:$0x1]
        %v236 = vld [vmem:[%s195 + $0x9c] sm:$0xf]
        %v237 = vld [vmem:[%s195 + $0xa0] sm:$0xf]
        %v238 = vld [vmem:[%s195 + $0xa4] sm:$0x1]
        %v239 = vld [vmem:[%s195 + $0xa8] sm:$0xf]
        %v240 = vld [vmem:[%s195 + $0xac] sm:$0xf]
        %v241 = vld [vmem:[%s195 + $0xb0] sm:$0x1]
        %v242 = vld [vmem:[%s195 + $0xb4] sm:$0xf]
        %v243 = vld [vmem:[%s195 + $0xb8] sm:$0xf]
        %v244 = vld [vmem:[%s195 + $0xbc] sm:$0x1]
        %v245 = vld [vmem:[%s195 + $0xc0] sm:$0xf]
        %v246 = vld [vmem:[%s195 + $0xc4] sm:$0xf]
        %v247 = vld [vmem:[%s195 + $0xc8] sm:$0x1]
        %v248 = vld [vmem:[%s195 + $0xcc] sm:$0xf]
        %v249 = vld [vmem:[%s195 + $0xd0] sm:$0xf]
        %v250 = vld [vmem:[%s195 + $0xd4] sm:$0x1]
        %v283 = vunpack.c.l.b16 %v197
        %v284 = vunpack.c.l.b16 %v198
        %v285 = vunpack.c.l.b16 %v200
        %v286 = vunpack.c.l.b16 %v201
        %v287 = vunpack.c.l.b16 %v203
        %v288 = vunpack.c.l.b16 %v204
        %v289 = vunpack.c.l.b16 %v206
        %v290 = vunpack.c.l.b16 %v207
        %v291 = vunpack.c.l.b16 %v209
        %v292 = vunpack.c.l.b16 %v210
        %v293 = vunpack.c.l.b16 %v212
        %v294 = vunpack.c.l.b16 %v213
        %v295 = vunpack.c.l.b16 %v215
        %v296 = vunpack.c.l.b16 %v216
        %v297 = vunpack.c.l.b16 %v218
        %v298 = vunpack.c.l.b16 %v219
        %v299 = vunpack.c.l.b16 %v221
        %v300 = vunpack.c.l.b16 %v222
        %v301 = vunpack.c.l.b16 %v224
        %v302 = vunpack.c.l.b16 %v225
        %v303 = vunpack.c.l.b16 %v227
        %v304 = vunpack.c.l.b16 %v228
        %v305 = vunpack.c.l.b16 %v230
        %v306 = vunpack.c.l.b16 %v231
        %v307 = vunpack.c.l.b16 %v233
        %v308 = vunpack.c.l.b16 %v234
        %v309 = vunpack.c.l.b16 %v236
        %v310 = vunpack.c.l.b16 %v237
        %v311 = vunpack.c.l.b16 %v239
        %v312 = vunpack.c.l.b16 %v240
        %v313 = vunpack.c.l.b16 %v242
        %v314 = vunpack.c.l.b16 %v243
        %v315 = vpack.c.b16 %v284, %v283
        %v316 = vpack.c.b16 %v286, %v285
        %v317 = vpack.c.b16 %v288, %v287
        %v318 = vpack.c.b16 %v290, %v289
        %v319 = vpack.c.b16 %v292, %v291
        %v320 = vpack.c.b16 %v294, %v293
        %v321 = vpack.c.b16 %v296, %v295
        %v322 = vpack.c.b16 %v298, %v297
        %v323 = vpack.c.b16 %v300, %v299
        %v324 = vpack.c.b16 %v302, %v301
        %v325 = vpack.c.b16 %v304, %v303
        %v326 = vpack.c.b16 %v306, %v305
        %v327 = vpack.c.b16 %v308, %v307
        %v328 = vpack.c.b16 %v310, %v309
        %v329 = vpack.c.b16 %v312, %v311
        %v330 = vpack.c.b16 %v314, %v313
        %v347 = vunpack.c.l.b16 %v199
        %v348 = vunpack.c.l.b16 %v202
        %v349 = vunpack.c.l.b16 %v205
        %v350 = vunpack.c.l.b16 %v208
        %v351 = vunpack.c.l.b16 %v211
        %v352 = vunpack.c.l.b16 %v214
        %v353 = vunpack.c.l.b16 %v217
        %v354 = vunpack.c.l.b16 %v220
        %v355 = vunpack.c.l.b16 %v223
        %v356 = vunpack.c.l.b16 %v226
        %v357 = vunpack.c.l.b16 %v229
        %v358 = vunpack.c.l.b16 %v232
        %v359 = vunpack.c.l.b16 %v235
        %v360 = vunpack.c.l.b16 %v238
        %v361 = vunpack.c.l.b16 %v241
        %v362 = vunpack.c.l.b16 %v244
        %v363 = vpack.c.b16 %v347, %v347
        %v364 = vpack.c.b16 %v348, %v348
        %v365 = vpack.c.b16 %v349, %v349
        %v366 = vpack.c.b16 %v350, %v350
        %v367 = vpack.c.b16 %v351, %v351
        %v368 = vpack.c.b16 %v352, %v352
        %v369 = vpack.c.b16 %v353, %v353
        %v370 = vpack.c.b16 %v354, %v354
        %v371 = vpack.c.b16 %v355, %v355
        %v372 = vpack.c.b16 %v356, %v356
        %v373 = vpack.c.b16 %v357, %v357
        %v374 = vpack.c.b16 %v358, %v358
        %v375 = vpack.c.b16 %v359, %v359
        %v376 = vpack.c.b16 %v360, %v360
        %v377 = vpack.c.b16 %v361, %v361
        %v378 = vpack.c.b16 %v362, %v362
        %vm379 = vsmask.f32 7424
        %v381 = vshrl.u32 %v315, 16
        %v383 = vshll.u32 %v315, 16
        %v385 = vrot.slane %v383, 1
        %v386 = vor.u32 %v381, %v385
        %v388 = vshll.u32 %v363, 16
        %v390 = vrot.slane %v388, 1
        %v391 = vsel %vm379, %v386, %v390
        %v393 = vshrl.u32 %v316, 16
        %v395 = vshll.u32 %v316, 16
        %v397 = vrot.slane %v395, 1
        %v398 = vor.u32 %v393, %v397
        %v400 = vshll.u32 %v364, 16
        %v402 = vrot.slane %v400, 1
        %v403 = vsel %vm379, %v398, %v402
        %v405 = vshrl.u32 %v317, 16
        %v407 = vshll.u32 %v317, 16
        %v409 = vrot.slane %v407, 1
        %v410 = vor.u32 %v405, %v409
        %v412 = vshll.u32 %v365, 16
        %v414 = vrot.slane %v412, 1
        %v415 = vsel %vm379, %v410, %v414
        %v417 = vshrl.u32 %v318, 16
        %v419 = vshll.u32 %v318, 16
        %v421 = vrot.slane %v419, 1
        %v422 = vor.u32 %v417, %v421
        %v424 = vshll.u32 %v366, 16
        %v426 = vrot.slane %v424, 1
        %v427 = vsel %vm379, %v422, %v426
        %v429 = vshrl.u32 %v319, 16
        %v431 = vshll.u32 %v319, 16
        %v433 = vrot.slane %v431, 1
        %v434 = vor.u32 %v429, %v433
        %v436 = vshll.u32 %v367, 16
        %v438 = vrot.slane %v436, 1
        %v439 = vsel %vm379, %v434, %v438
        %v441 = vshrl.u32 %v320, 16
        %v443 = vshll.u32 %v320, 16
        %v445 = vrot.slane %v443, 1
        %v446 = vor.u32 %v441, %v445
        %v448 = vshll.u32 %v368, 16
        %v450 = vrot.slane %v448, 1
        %v451 = vsel %vm379, %v446, %v450
        %v453 = vshrl.u32 %v321, 16
        %v455 = vshll.u32 %v321, 16
        %v457 = vrot.slane %v455, 1
        %v458 = vor.u32 %v453, %v457
        %v460 = vshll.u32 %v369, 16
        %v462 = vrot.slane %v460, 1
        %v463 = vsel %vm379, %v458, %v462
        %v465 = vshrl.u32 %v322, 16
        %v467 = vshll.u32 %v322, 16
        %v469 = vrot.slane %v467, 1
        %v470 = vor.u32 %v465, %v469
        %v472 = vshll.u32 %v370, 16
        %v474 = vrot.slane %v472, 1
        %v475 = vsel %vm379, %v470, %v474
        %v477 = vshrl.u32 %v323, 16
        %v479 = vshll.u32 %v323, 16
        %v481 = vrot.slane %v479, 1
        %v482 = vor.u32 %v477, %v481
        %v484 = vshll.u32 %v371, 16
        %v486 = vrot.slane %v484, 1
        %v487 = vsel %vm379, %v482, %v486
        %v489 = vshrl.u32 %v324, 16
        %v491 = vshll.u32 %v324, 16
        %v493 = vrot.slane %v491, 1
        %v494 = vor.u32 %v489, %v493
        %v496 = vshll.u32 %v372, 16
        %v498 = vrot.slane %v496, 1
        %v499 = vsel %vm379, %v494, %v498
        %v501 = vshrl.u32 %v325, 16
        %v503 = vshll.u32 %v325, 16
        %v505 = vrot.slane %v503, 1
        %v506 = vor.u32 %v501, %v505
        %v508 = vshll.u32 %v373, 16
        %v510 = vrot.slane %v508, 1
        %v511 = vsel %vm379, %v506, %v510
        %v513 = vshrl.u32 %v326, 16
        %v515 = vshll.u32 %v326, 16
        %v517 = vrot.slane %v515, 1
        %v518 = vor.u32 %v513, %v517
        %v520 = vshll.u32 %v374, 16
        %v522 = vrot.slane %v520, 1
        %v523 = vsel %vm379, %v518, %v522
        %v525 = vshrl.u32 %v327, 16
        %v527 = vshll.u32 %v327, 16
        %v529 = vrot.slane %v527, 1
        %v530 = vor.u32 %v525, %v529
        %v532 = vshll.u32 %v375, 16
        %v534 = vrot.slane %v532, 1
        %v535 = vsel %vm379, %v530, %v534
        %v537 = vshrl.u32 %v328, 16
        %v539 = vshll.u32 %v328, 16
        %v541 = vrot.slane %v539, 1
        %v542 = vor.u32 %v537, %v541
        %v544 = vshll.u32 %v376, 16
        %v546 = vrot.slane %v544, 1
        %v547 = vsel %vm379, %v542, %v546
        %v549 = vshrl.u32 %v329, 16
        %v551 = vshll.u32 %v329, 16
        %v553 = vrot.slane %v551, 1
        %v554 = vor.u32 %v549, %v553
        %v556 = vshll.u32 %v377, 16
        %v558 = vrot.slane %v556, 1
        %v559 = vsel %vm379, %v554, %v558
        %v561 = vshrl.u32 %v330, 16
        %v563 = vshll.u32 %v330, 16
        %v565 = vrot.slane %v563, 1
        %v566 = vor.u32 %v561, %v565
        %v568 = vshll.u32 %v378, 16
        %v570 = vrot.slane %v568, 1
        %v571 = vsel %vm379, %v566, %v570
        %572 = vrot.lane.b32.xlu0 %v391, 1
        %v573 = vpop.permute.xlu0 %572
        %574 = vrot.lane.b32.xlu0 %v403, 1
        %v575 = vpop.permute.xlu0 %574
        %576 = vrot.lane.b32.xlu0 %v415, 1
        %v577 = vpop.permute.xlu0 %576
        %578 = vrot.lane.b32.xlu0 %v427, 1
        %v579 = vpop.permute.xlu0 %578
        %580 = vrot.lane.b32.xlu0 %v439, 1
        %v581 = vpop.permute.xlu0 %580
        %582 = vrot.lane.b32.xlu0 %v451, 1
        %v583 = vpop.permute.xlu0 %582
        %584 = vrot.lane.b32.xlu0 %v463, 1
        %v585 = vpop.permute.xlu0 %584
        %586 = vrot.lane.b32.xlu0 %v475, 1
        %v587 = vpop.permute.xlu0 %586
        %588 = vrot.lane.b32.xlu0 %v487, 1
        %v589 = vpop.permute.xlu0 %588
        %590 = vrot.lane.b32.xlu0 %v499, 1
        %v591 = vpop.permute.xlu0 %590
        %592 = vrot.lane.b32.xlu0 %v511, 1
        %v593 = vpop.permute.xlu0 %592
        %594 = vrot.lane.b32.xlu0 %v523, 1
        %v595 = vpop.permute.xlu0 %594
        %596 = vrot.lane.b32.xlu0 %v535, 1
        %v597 = vpop.permute.xlu0 %596
        %598 = vrot.lane.b32.xlu0 %v547, 1
        %v599 = vpop.permute.xlu0 %598
        %600 = vrot.lane.b32.xlu0 %v559, 1
        %v601 = vpop.permute.xlu0 %600
        %602 = vrot.lane.b32.xlu0 %v571, 1
        %v603 = vpop.permute.xlu0 %602
        %vm604 = vcmask 1046528
        %v605 = vrot.slane %v315, 1
        %v606 = vrot.slane %v363, 1
        %v607 = vsel %vm604, %v605, %v606
        %v608 = vrot.slane %v316, 1
        %v609 = vrot.slane %v364, 1
        %v610 = vsel %vm604, %v608, %v609
        %v611 = vrot.slane %v317, 1
        %v612 = vrot.slane %v365, 1
        %v613 = vsel %vm604, %v611, %v612
        %v614 = vrot.slane %v318, 1
        %v615 = vrot.slane %v366, 1
        %v616 = vsel %vm604, %v614, %v615
        %v617 = vrot.slane %v319, 1
        %v618 = vrot.slane %v367, 1
        %v619 = vsel %vm604, %v617, %v618
        %v620 = vrot.slane %v320, 1
        %v621 = vrot.slane %v368, 1
        %v622 = vsel %vm604, %v620, %v621
        %v623 = vrot.slane %v321, 1
        %v624 = vrot.slane %v369, 1
        %v625 = vsel %vm604, %v623, %v624
        %v626 = vrot.slane %v322, 1
        %v627 = vrot.slane %v370, 1
        %v628 = vsel %vm604, %v626, %v627
        %v629 = vrot.slane %v323, 1
        %v630 = vrot.slane %v371, 1
        %v631 = vsel %vm604, %v629, %v630
        %v632 = vrot.slane %v324, 1
        %v633 = vrot.slane %v372, 1
        %v634 = vsel %vm604, %v632, %v633
        %v635 = vrot.slane %v325, 1
        %v636 = vrot.slane %v373, 1
        %v637 = vsel %vm604, %v635, %v636
        %v638 = vrot.slane %v326, 1
        %v639 = vrot.slane %v374, 1
        %v640 = vsel %vm604, %v638, %v639
        %v641 = vrot.slane %v327, 1
        %v642 = vrot.slane %v375, 1
        %v643 = vsel %vm604, %v641, %v642
        %v644 = vrot.slane %v328, 1
        %v645 = vrot.slane %v376, 1
        %v646 = vsel %vm604, %v644, %v645
        %v647 = vrot.slane %v329, 1
        %v648 = vrot.slane %v377, 1
        %v649 = vsel %vm604, %v647, %v648
        %v650 = vrot.slane %v330, 1
        %v651 = vrot.slane %v378, 1
        %v652 = vsel %vm604, %v650, %v651
        %653 = vrot.lane.b32.xlu0 %v607, 2
        %v654 = vpop.permute.xlu0 %653
        %655 = vrot.lane.b32.xlu0 %v610, 2
        %v656 = vpop.permute.xlu0 %655
        %657 = vrot.lane.b32.xlu0 %v613, 2
        %v658 = vpop.permute.xlu0 %657
        %659 = vrot.lane.b32.xlu0 %v616, 2
        %v660 = vpop.permute.xlu0 %659
        %661 = vrot.lane.b32.xlu0 %v619, 2
        %v662 = vpop.permute.xlu0 %661
        %663 = vrot.lane.b32.xlu0 %v622, 2
        %v664 = vpop.permute.xlu0 %663
        %665 = vrot.lane.b32.xlu0 %v625, 2
        %v666 = vpop.permute.xlu0 %665
        %667 = vrot.lane.b32.xlu0 %v628, 2
        %v668 = vpop.permute.xlu0 %667
        %669 = vrot.lane.b32.xlu0 %v631, 2
        %v670 = vpop.permute.xlu0 %669
        %671 = vrot.lane.b32.xlu0 %v634, 2
        %v672 = vpop.permute.xlu0 %671
        %673 = vrot.lane.b32.xlu0 %v637, 2
        %v674 = vpop.permute.xlu0 %673
        %675 = vrot.lane.b32.xlu0 %v640, 2
        %v676 = vpop.permute.xlu0 %675
        %677 = vrot.lane.b32.xlu0 %v643, 2
        %v678 = vpop.permute.xlu0 %677
        %679 = vrot.lane.b32.xlu0 %v646, 2
        %v680 = vpop.permute.xlu0 %679
        %681 = vrot.lane.b32.xlu0 %v649, 2
        %v682 = vpop.permute.xlu0 %681
        %683 = vrot.lane.b32.xlu0 %v652, 2
        %v684 = vpop.permute.xlu0 %683
        %v687 = vunpack.c.l.b16 %v245
        %v688 = vunpack.c.l.b16 %v246
        %v689 = vpack.c.b16 %v688, %v687
        %690 = vrot.lane.b32.xlu0 %v316, 3
        %v691 = vpop.permute.xlu0 %690
        %692 = vrot.lane.b32.xlu0 %v317, 3
        %v693 = vpop.permute.xlu0 %692
        %694 = vrot.lane.b32.xlu0 %v318, 3
        %v695 = vpop.permute.xlu0 %694
        %696 = vrot.lane.b32.xlu0 %v319, 3
        %v697 = vpop.permute.xlu0 %696
        %698 = vrot.lane.b32.xlu0 %v320, 3
        %v699 = vpop.permute.xlu0 %698
        %700 = vrot.lane.b32.xlu0 %v321, 3
        %v701 = vpop.permute.xlu0 %700
        %702 = vrot.lane.b32.xlu0 %v322, 3
        %v703 = vpop.permute.xlu0 %702
        %704 = vrot.lane.b32.xlu0 %v323, 3
        %v705 = vpop.permute.xlu0 %704
        %706 = vrot.lane.b32.xlu0 %v324, 3
        %v707 = vpop.permute.xlu0 %706
        %708 = vrot.lane.b32.xlu0 %v325, 3
        %v709 = vpop.permute.xlu0 %708
        %710 = vrot.lane.b32.xlu0 %v326, 3
        %v711 = vpop.permute.xlu0 %710
        %712 = vrot.lane.b32.xlu0 %v327, 3
        %v713 = vpop.permute.xlu0 %712
        %714 = vrot.lane.b32.xlu0 %v328, 3
        %v715 = vpop.permute.xlu0 %714
        %716 = vrot.lane.b32.xlu0 %v329, 3
        %v717 = vpop.permute.xlu0 %716
        %718 = vrot.lane.b32.xlu0 %v330, 3
        %v719 = vpop.permute.xlu0 %718
        %720 = vrot.lane.b32.xlu0 %v689, 3
        %v721 = vpop.permute.xlu0 %720
        %v723 = vunpack.c.l.b16 %v247
        %v724 = vpack.c.b16 %v723, %v723
        %v726 = vshrl.u32 %v689, 16
        %v728 = vshll.u32 %v689, 16
        %v730 = vrot.slane %v728, 1
        %v731 = vor.u32 %v726, %v730
        %v733 = vshll.u32 %v724, 16
        %v735 = vrot.slane %v733, 1
        %v736 = vsel %vm379, %v731, %v735
        %737 = vrot.lane.b32.xlu0 %v403, 4
        %v738 = vpop.permute.xlu0 %737
        %739 = vrot.lane.b32.xlu0 %v415, 4
        %v740 = vpop.permute.xlu0 %739
        %741 = vrot.lane.b32.xlu0 %v427, 4
        %v742 = vpop.permute.xlu0 %741
        %743 = vrot.lane.b32.xlu0 %v439, 4
        %v744 = vpop.permute.xlu0 %743
        %745 = vrot.lane.b32.xlu0 %v451, 4
        %v746 = vpop.permute.xlu0 %745
        %747 = vrot.lane.b32.xlu0 %v463, 4
        %v748 = vpop.permute.xlu0 %747
        %749 = vrot.lane.b32.xlu0 %v475, 4
        %v750 = vpop.permute.xlu0 %749
        %751 = vrot.lane.b32.xlu0 %v487, 4
        %v752 = vpop.permute.xlu0 %751
        %753 = vrot.lane.b32.xlu0 %v499, 4
        %v754 = vpop.permute.xlu0 %753
        %755 = vrot.lane.b32.xlu0 %v511, 4
        %v756 = vpop.permute.xlu0 %755
        %757 = vrot.lane.b32.xlu0 %v523, 4
        %v758 = vpop.permute.xlu0 %757
        %759 = vrot.lane.b32.xlu0 %v535, 4
        %v760 = vpop.permute.xlu0 %759
        %761 = vrot.lane.b32.xlu0 %v547, 4
        %v762 = vpop.permute.xlu0 %761
        %763 = vrot.lane.b32.xlu0 %v559, 4
        %v764 = vpop.permute.xlu0 %763
        %765 = vrot.lane.b32.xlu0 %v571, 4
        %v766 = vpop.permute.xlu0 %765
        %767 = vrot.lane.b32.xlu0 %v736, 4
        %v768 = vpop.permute.xlu0 %767
        %v769 = vrot.slane %v689, 1
        %v770 = vrot.slane %v724, 1
        %v771 = vsel %vm604, %v769, %v770
        %772 = vrot.lane.b32.xlu0 %v610, 5
        %v773 = vpop.permute.xlu0 %772
        %774 = vrot.lane.b32.xlu0 %v613, 5
        %v775 = vpop.permute.xlu0 %774
        %776 = vrot.lane.b32.xlu0 %v616, 5
        %v777 = vpop.permute.xlu0 %776
        %778 = vrot.lane.b32.xlu0 %v619, 5
        %v779 = vpop.permute.xlu0 %778
        %780 = vrot.lane.b32.xlu0 %v622, 5
        %v781 = vpop.permute.xlu0 %780
        %782 = vrot.lane.b32.xlu0 %v625, 5
        %v783 = vpop.permute.xlu0 %782
        %784 = vrot.lane.b32.xlu0 %v628, 5
        %v785 = vpop.permute.xlu0 %784
        %786 = vrot.lane.b32.xlu0 %v631, 5
        %v787 = vpop.permute.xlu0 %786
        %788 = vrot.lane.b32.xlu0 %v634, 5
        %v789 = vpop.permute.xlu0 %788
        %790 = vrot.lane.b32.xlu0 %v637, 5
        %v791 = vpop.permute.xlu0 %790
        %792 = vrot.lane.b32.xlu0 %v640, 5
        %v793 = vpop.permute.xlu0 %792
        %794 = vrot.lane.b32.xlu0 %v643, 5
        %v795 = vpop.permute.xlu0 %794
        %796 = vrot.lane.b32.xlu0 %v646, 5
        %v797 = vpop.permute.xlu0 %796
        %798 = vrot.lane.b32.xlu0 %v649, 5
        %v799 = vpop.permute.xlu0 %798
        %800 = vrot.lane.b32.xlu0 %v652, 5
        %v801 = vpop.permute.xlu0 %800
        %802 = vrot.lane.b32.xlu0 %v771, 5
        %v803 = vpop.permute.xlu0 %802
        %v806 = vunpack.c.l.b16 %v248
        %v807 = vunpack.c.l.b16 %v249
        %v808 = vpack.c.b16 %v807, %v806
        %809 = vrot.lane.b32.xlu0 %v317, 6
        %v810 = vpop.permute.xlu0 %809
        %811 = vrot.lane.b32.xlu0 %v318, 6
        %v812 = vpop.permute.xlu0 %811
        %813 = vrot.lane.b32.xlu0 %v319, 6
        %v814 = vpop.permute.xlu0 %813
        %815 = vrot.lane.b32.xlu0 %v320, 6
        %v816 = vpop.permute.xlu0 %815
        %817 = vrot.lane.b32.xlu0 %v321, 6
        %v818 = vpop.permute.xlu0 %817
        %819 = vrot.lane.b32.xlu0 %v322, 6
        %v820 = vpop.permute.xlu0 %819
        %821 = vrot.lane.b32.xlu0 %v323, 6
        %v822 = vpop.permute.xlu0 %821
        %823 = vrot.lane.b32.xlu0 %v324, 6
        %v824 = vpop.permute.xlu0 %823
        %825 = vrot.lane.b32.xlu0 %v325, 6
        %v826 = vpop.permute.xlu0 %825
        %827 = vrot.lane.b32.xlu0 %v326, 6
        %v828 = vpop.permute.xlu0 %827
        %829 = vrot.lane.b32.xlu0 %v327, 6
        %v830 = vpop.permute.xlu0 %829
        %831 = vrot.lane.b32.xlu0 %v328, 6
        %v832 = vpop.permute.xlu0 %831
        %833 = vrot.lane.b32.xlu0 %v329, 6
        %v834 = vpop.permute.xlu0 %833
        %835 = vrot.lane.b32.xlu0 %v330, 6
        %v836 = vpop.permute.xlu0 %835
        %837 = vrot.lane.b32.xlu0 %v689, 6
        %v838 = vpop.permute.xlu0 %837
        %839 = vrot.lane.b32.xlu0 %v808, 6
        %v840 = vpop.permute.xlu0 %839
        %v842 = vunpack.c.l.b16 %v250
        %v843 = vpack.c.b16 %v842, %v842
        %v845 = vshrl.u32 %v808, 16
        %v847 = vshll.u32 %v808, 16
        %v849 = vrot.slane %v847, 1
        %v850 = vor.u32 %v845, %v849
        %v852 = vshll.u32 %v843, 16
        %v854 = vrot.slane %v852, 1
        %v855 = vsel %vm379, %v850, %v854
        %856 = vrot.lane.b32.xlu0 %v415, 7
        %v857 = vpop.permute.xlu0 %856
        %858 = vrot.lane.b32.xlu0 %v427, 7
        %v859 = vpop.permute.xlu0 %858
        %860 = vrot.lane.b32.xlu0 %v439, 7
        %v861 = vpop.permute.xlu0 %860
        %862 = vrot.lane.b32.xlu0 %v451, 7
        %v863 = vpop.permute.xlu0 %862
        %864 = vrot.lane.b32.xlu0 %v463, 7
        %v865 = vpop.permute.xlu0 %864
        %866 = vrot.lane.b32.xlu0 %v475, 7
        %v867 = vpop.permute.xlu0 %866
        %868 = vrot.lane.b32.xlu0 %v487, 7
        %v869 = vpop.permute.xlu0 %868
        %870 = vrot.lane.b32.xlu0 %v499, 7
        %v871 = vpop.permute.xlu0 %870
        %872 = vrot.lane.b32.xlu0 %v511, 7
        %v873 = vpop.permute.xlu0 %872
        %874 = vrot.lane.b32.xlu0 %v523, 7
        %v875 = vpop.permute.xlu0 %874
        %876 = vrot.lane.b32.xlu0 %v535, 7
        %v877 = vpop.permute.xlu0 %876
        %878 = vrot.lane.b32.xlu0 %v547, 7
        %v879 = vpop.permute.xlu0 %878
        %880 = vrot.lane.b32.xlu0 %v559, 7
        %v881 = vpop.permute.xlu0 %880
        %882 = vrot.lane.b32.xlu0 %v571, 7
        %v883 = vpop.permute.xlu0 %882
        %884 = vrot.lane.b32.xlu0 %v736, 7
        %v885 = vpop.permute.xlu0 %884
        %886 = vrot.lane.b32.xlu0 %v855, 7
        %v887 = vpop.permute.xlu0 %886
        %v888 = vrot.slane %v808, 1
        %v889 = vrot.slane %v843, 1
        %v890 = vsel %vm604, %v888, %v889
        %891 = vrot.lane.b32.xlu0 %v613, 8
        %v892 = vpop.permute.xlu0 %891
        %893 = vrot.lane.b32.xlu0 %v616, 8
        %v894 = vpop.permute.xlu0 %893
        %895 = vrot.lane.b32.xlu0 %v619, 8
        %v896 = vpop.permute.xlu0 %895
        %897 = vrot.lane.b32.xlu0 %v622, 8
        %v898 = vpop.permute.xlu0 %897
        %899 = vrot.lane.b32.xlu0 %v625, 8
        %v900 = vpop.permute.xlu0 %899
        %901 = vrot.lane.b32.xlu0 %v628, 8
        %v902 = vpop.permute.xlu0 %901
        %903 = vrot.lane.b32.xlu0 %v631, 8
        %v904 = vpop.permute.xlu0 %903
        %905 = vrot.lane.b32.xlu0 %v634, 8
        %v906 = vpop.permute.xlu0 %905
        %907 = vrot.lane.b32.xlu0 %v637, 8
        %v908 = vpop.permute.xlu0 %907
        %909 = vrot.lane.b32.xlu0 %v640, 8
        %v910 = vpop.permute.xlu0 %909
        %911 = vrot.lane.b32.xlu0 %v643, 8
        %v912 = vpop.permute.xlu0 %911
        %913 = vrot.lane.b32.xlu0 %v646, 8
        %v914 = vpop.permute.xlu0 %913
        %915 = vrot.lane.b32.xlu0 %v649, 8
        %v916 = vpop.permute.xlu0 %915
        %917 = vrot.lane.b32.xlu0 %v652, 8
        %v918 = vpop.permute.xlu0 %917
        %919 = vrot.lane.b32.xlu0 %v771, 8
        %v920 = vpop.permute.xlu0 %919
        %921 = vrot.lane.b32.xlu0 %v890, 8
        %v922 = vpop.permute.xlu0 %921
        %vm923 = vcmask 7168
        %v925 = vsel %vm923, %v315, %v573
        %v927 = vsel %vm923, %v316, %v575
        %v929 = vsel %vm923, %v317, %v577
        %v931 = vsel %vm923, %v318, %v579
        %v933 = vsel %vm923, %v319, %v581
        %v935 = vsel %vm923, %v320, %v583
        %v937 = vsel %vm923, %v321, %v585
        %v939 = vsel %vm923, %v322, %v587
        %v941 = vsel %vm923, %v323, %v589
        %v943 = vsel %vm923, %v324, %v591
        %v945 = vsel %vm923, %v325, %v593
        %v947 = vsel %vm923, %v326, %v595
        %v949 = vsel %vm923, %v327, %v597
        %v951 = vsel %vm923, %v328, %v599
        %v953 = vsel %vm923, %v329, %v601
        %v955 = vsel %vm923, %v330, %v603
        %vm956 = vcmask 15360
        %v958 = vsel %vm956, %v925, %v654
        %v960 = vsel %vm956, %v927, %v656
        %v962 = vsel %vm956, %v929, %v658
        %v964 = vsel %vm956, %v931, %v660
        %v966 = vsel %vm956, %v933, %v662
        %v968 = vsel %vm956, %v935, %v664
        %v970 = vsel %vm956, %v937, %v666
        %v972 = vsel %vm956, %v939, %v668
        %v974 = vsel %vm956, %v941, %v670
        %v976 = vsel %vm956, %v943, %v672
        %v978 = vsel %vm956, %v945, %v674
        %v980 = vsel %vm956, %v947, %v676
        %v982 = vsel %vm956, %v949, %v678
        %v984 = vsel %vm956, %v951, %v680
        %v986 = vsel %vm956, %v953, %v682
        %v988 = vsel %vm956, %v955, %v684
        %vm989 = vcmask 23552
        %v991 = vsel %vm989, %v958, %v691
        %v993 = vsel %vm989, %v960, %v693
        %v995 = vsel %vm989, %v962, %v695
        %v997 = vsel %vm989, %v964, %v697
        %v999 = vsel %vm989, %v966, %v699
        %v1001 = vsel %vm989, %v968, %v701
        %v1003 = vsel %vm989, %v970, %v703
        %v1005 = vsel %vm989, %v972, %v705
        %v1007 = vsel %vm989, %v974, %v707
        %v1009 = vsel %vm989, %v976, %v709
        %v1011 = vsel %vm989, %v978, %v711
        %v1013 = vsel %vm989, %v980, %v713
        %v1015 = vsel %vm989, %v982, %v715
        %v1017 = vsel %vm989, %v984, %v717
        %v1019 = vsel %vm989, %v986, %v719
        %v1021 = vsel %vm989, %v988, %v721
        %vm1022 = vcmask 31744
        %v1024 = vsel %vm1022, %v991, %v738
        %v1026 = vsel %vm1022, %v993, %v740
        %v1028 = vsel %vm1022, %v995, %v742
        %v1030 = vsel %vm1022, %v997, %v744
        %v1032 = vsel %vm1022, %v999, %v746
        %v1034 = vsel %vm1022, %v1001, %v748
        %v1036 = vsel %vm1022, %v1003, %v750
        %v1038 = vsel %vm1022, %v1005, %v752
        %v1040 = vsel %vm1022, %v1007, %v754
        %v1042 = vsel %vm1022, %v1009, %v756
        %v1044 = vsel %vm1022, %v1011, %v758
        %v1046 = vsel %vm1022, %v1013, %v760
        %v1048 = vsel %vm1022, %v1015, %v762
        %v1050 = vsel %vm1022, %v1017, %v764
        %v1052 = vsel %vm1022, %v1019, %v766
        %v1054 = vsel %vm1022, %v1021, %v768
        %vm1055 = vcmask 39936
        %v1057 = vsel %vm1055, %v1024, %v773
        %v1059 = vsel %vm1055, %v1026, %v775
        %v1061 = vsel %vm1055, %v1028, %v777
        %v1063 = vsel %vm1055, %v1030, %v779
        %v1065 = vsel %vm1055, %v1032, %v781
        %v1067 = vsel %vm1055, %v1034, %v783
        %v1069 = vsel %vm1055, %v1036, %v785
        %v1071 = vsel %vm1055, %v1038, %v787
        %v1073 = vsel %vm1055, %v1040, %v789
        %v1075 = vsel %vm1055, %v1042, %v791
        %v1077 = vsel %vm1055, %v1044, %v793
        %v1079 = vsel %vm1055, %v1046, %v795
        %v1081 = vsel %vm1055, %v1048, %v797
        %v1083 = vsel %vm1055, %v1050, %v799
        %v1085 = vsel %vm1055, %v1052, %v801
        %v1087 = vsel %vm1055, %v1054, %v803
        %vm1088 = vcmask 48128
        %v1090 = vsel %vm1088, %v1057, %v810
        %v1092 = vsel %vm1088, %v1059, %v812
        %v1094 = vsel %vm1088, %v1061, %v814
        %v1096 = vsel %vm1088, %v1063, %v816
        %v1098 = vsel %vm1088, %v1065, %v818
        %v1100 = vsel %vm1088, %v1067, %v820
        %v1102 = vsel %vm1088, %v1069, %v822
        %v1104 = vsel %vm1088, %v1071, %v824
        %v1106 = vsel %vm1088, %v1073, %v826
        %v1108 = vsel %vm1088, %v1075, %v828
        %v1110 = vsel %vm1088, %v1077, %v830
        %v1112 = vsel %vm1088, %v1079, %v832
        %v1114 = vsel %vm1088, %v1081, %v834
        %v1116 = vsel %vm1088, %v1083, %v836
        %v1118 = vsel %vm1088, %v1085, %v838
        %v1120 = vsel %vm1088, %v1087, %v840
        %vm1121 = vcmask 56320
        %v1123 = vsel %vm1121, %v1090, %v857
        %v1125 = vsel %vm1121, %v1092, %v859
        %v1127 = vsel %vm1121, %v1094, %v861
        %v1129 = vsel %vm1121, %v1096, %v863
        %v1131 = vsel %vm1121, %v1098, %v865
        %v1133 = vsel %vm1121, %v1100, %v867
        %v1135 = vsel %vm1121, %v1102, %v869
        %v1137 = vsel %vm1121, %v1104, %v871
        %v1139 = vsel %vm1121, %v1106, %v873
        %v1141 = vsel %vm1121, %v1108, %v875
        %v1143 = vsel %vm1121, %v1110, %v877
        %v1145 = vsel %vm1121, %v1112, %v879
        %v1147 = vsel %vm1121, %v1114, %v881
        %v1149 = vsel %vm1121, %v1116, %v883
        %v1151 = vsel %vm1121, %v1118, %v885
        %v1153 = vsel %vm1121, %v1120, %v887
        %vm1154 = vcmask 64512
        %v1156 = vsel %vm1154, %v1123, %v892
        %v1158 = vsel %vm1154, %v1125, %v894
        %v1160 = vsel %vm1154, %v1127, %v896
        %v1162 = vsel %vm1154, %v1129, %v898
        %v1164 = vsel %vm1154, %v1131, %v900
        %v1166 = vsel %vm1154, %v1133, %v902
        %v1168 = vsel %vm1154, %v1135, %v904
        %v1170 = vsel %vm1154, %v1137, %v906
        %v1172 = vsel %vm1154, %v1139, %v908
        %v1174 = vsel %vm1154, %v1141, %v910
        %v1176 = vsel %vm1154, %v1143, %v912
        %v1178 = vsel %vm1154, %v1145, %v914
        %v1180 = vsel %vm1154, %v1147, %v916
        %v1182 = vsel %vm1154, %v1149, %v918
        %v1184 = vsel %vm1154, %v1151, %v920
        %v1186 = vsel %vm1154, %v1153, %v922
        %v1187 = vld [vmem:[%s1] sm:$0xf]
        %v1188 = vld [vmem:[%s1 + $0x4] sm:$0x1]
        %v1191 = vunpack.c.l.b16 %v1187
        %v1192 = vunpack.c.l.b16 %v1188
        %v1193 = vpack.c.b16 %v1192, %v1191
        %vm1194 = vcmask 72704
        %v1195 = vsel %vm1194, %v1156, 0
        %v1197 = vsel %vm1194, %v1158, 0
        %v1199 = vsel %vm1194, %v1160, 0
        %v1201 = vsel %vm1194, %v1162, 0
        %v1203 = vsel %vm1194, %v1164, 0
        %v1205 = vsel %vm1194, %v1166, 0
        %v1207 = vsel %vm1194, %v1168, 0
        %v1209 = vsel %vm1194, %v1170, 0
        %v1211 = vsel %vm1194, %v1172, 0
        %v1213 = vsel %vm1194, %v1174, 0
        %v1215 = vsel %vm1194, %v1176, 0
        %v1217 = vsel %vm1194, %v1178, 0
        %v1219 = vsel %vm1194, %v1180, 0
        %v1221 = vsel %vm1194, %v1182, 0
        %v1223 = vsel %vm1194, %v1184, 0
        %v1225 = vsel %vm1194, %v1186, 0
        %vm1227 = vcmask 1043456
        %vm1228 = vcmask 1044480
        %v1229 = vsel %vm1227, 4294967295, 65535
        %v1230 = vsel %vm1228, %v1229, 0
        %v1232 = vand.u32 %v1193, %v1230
        %1234 = vmatprep.subr.bf16.mxu0 0
        %1235 = vmatpush1.bf16.msra.mxu0 0
        %1236 = vmatprep.subr.bf16.mxu0 0
        %1237 = vmatpush1.bf16.msra.mxu0 0
        %1238 = vmatprep.subr.bf16.mxu0 0
        %1239 = vmatpush1.bf16.msra.mxu0 0
        %1240 = vmatprep.subr.bf16.mxu0 0
        %1241 = vmatpush1.bf16.msra.mxu0 0
        %1242 = vmatprep.subr.bf16.mxu0 0
        %1243 = vmatpush1.bf16.msra.mxu0 0
        %1244 = vmatprep.subr.bf16.mxu0 0
        %1245 = vmatpush1.bf16.msra.mxu0 0
        %1246 = vmatprep.subr.bf16.mxu0 0
        %1247 = vmatpush1.bf16.msra.mxu0 0
        %1248 = vmatprep.subr.bf16.mxu0 0
        %1249 = vmatpush1.bf16.msra.mxu0 %v1232
        %1250 = vmatprep.subr.bf16.mxu0 0
        %1251 = vmatpush2.bf16.msra.mxu0 0
        %1252 = vmatprep.subr.bf16.mxu0 0
        %1253 = vmatpush2.bf16.msra.mxu0 0
        %1254 = vmatprep.subr.bf16.mxu0 0
        %1255 = vmatpush2.bf16.msra.mxu0 0
        %1256 = vmatprep.subr.bf16.mxu0 0
        %1257 = vmatpush2.bf16.msra.mxu0 0
        %1258 = vmatprep.subr.bf16.mxu0 0
        %1259 = vmatpush2.bf16.msra.mxu0 0
        %1260 = vmatprep.subr.bf16.mxu0 0
        %1261 = vmatpush2.bf16.msra.mxu0 0
        %1262 = vmatprep.subr.bf16.mxu0 0
        %1263 = vmatpush2.bf16.msra.mxu0 0
        %1264 = vmatprep.subr.bf16.mxu0 0
        %1265 = vmatpush2.bf16.msra.mxu0 0
        %1266 = vmatprep.mubr.bf16.mxu0 0
        %1267 = vmatmul.mubr.bf16.gmra.mxu0 %v1195
        %v1268 = vpop.f32.mrf.mxu0
        %v1269 = vadd.f32 0.0, %v1268
        %v1270 = vpop.f32.mrf.mxu0
        %v1271 = vpop.f32.mrf.mxu0
        %v1272 = vadd.f32 0.0, %v1271
        %v1273 = vpop.f32.mrf.mxu0
        %1274 = vmatprep.mubr.bf16.mxu0 0
        %1275 = vmatmul.mubr.bf16.gmra.mxu0 %v1197
        %v1276 = vpop.f32.mrf.mxu0
        %v1277 = vadd.f32 0.0, %v1276
        %v1278 = vpop.f32.mrf.mxu0
        %v1279 = vpop.f32.mrf.mxu0
        %v1280 = vadd.f32 0.0, %v1279
        %v1281 = vpop.f32.mrf.mxu0
        %1282 = vmatprep.mubr.bf16.mxu0 0
        %1283 = vmatmul.mubr.bf16.gmra.mxu0 %v1199
        %v1284 = vpop.f32.mrf.mxu0
        %v1285 = vadd.f32 0.0, %v1284
        %v1286 = vpop.f32.mrf.mxu0
        %v1287 = vpop.f32.mrf.mxu0
        %v1288 = vadd.f32 0.0, %v1287
        %v1289 = vpop.f32.mrf.mxu0
        %1290 = vmatprep.mubr.bf16.mxu0 0
        %1291 = vmatmul.mubr.bf16.gmra.mxu0 %v1201
        %v1292 = vpop.f32.mrf.mxu0
        %v1293 = vadd.f32 0.0, %v1292
        %v1294 = vpop.f32.mrf.mxu0
        %v1295 = vpop.f32.mrf.mxu0
        %v1296 = vadd.f32 0.0, %v1295
        %v1297 = vpop.f32.mrf.mxu0
        %1298 = vmatprep.mubr.bf16.mxu0 0
        %1299 = vmatmul.mubr.bf16.gmra.mxu0 %v1203
        %v1300 = vpop.f32.mrf.mxu0
        %v1301 = vadd.f32 0.0, %v1300
        %v1302 = vpop.f32.mrf.mxu0
        %v1303 = vpop.f32.mrf.mxu0
        %v1304 = vadd.f32 0.0, %v1303
        %v1305 = vpop.f32.mrf.mxu0
        %1306 = vmatprep.mubr.bf16.mxu0 0
        %1307 = vmatmul.mubr.bf16.gmra.mxu0 %v1205
        %v1308 = vpop.f32.mrf.mxu0
        %v1309 = vadd.f32 0.0, %v1308
        %v1310 = vpop.f32.mrf.mxu0
        %v1311 = vpop.f32.mrf.mxu0
        %v1312 = vadd.f32 0.0, %v1311
        %v1313 = vpop.f32.mrf.mxu0
        %1314 = vmatprep.mubr.bf16.mxu0 0
        %1315 = vmatmul.mubr.bf16.gmra.mxu0 %v1207
        %v1316 = vpop.f32.mrf.mxu0
        %v1317 = vadd.f32 0.0, %v1316
        %v1318 = vpop.f32.mrf.mxu0
        %v1319 = vpop.f32.mrf.mxu0
        %v1320 = vadd.f32 0.0, %v1319
        %v1321 = vpop.f32.mrf.mxu0
        %1322 = vmatprep.mubr.bf16.mxu0 0
        %1323 = vmatmul.mubr.bf16.gmra.mxu0 %v1209
        %v1324 = vpop.f32.mrf.mxu0
        %v1325 = vadd.f32 0.0, %v1324
        %v1326 = vpop.f32.mrf.mxu0
        %v1327 = vpop.f32.mrf.mxu0
        %v1328 = vadd.f32 0.0, %v1327
        %v1329 = vpop.f32.mrf.mxu0
        %1330 = vmatprep.mubr.bf16.mxu0 0
        %1331 = vmatmul.mubr.bf16.gmra.mxu0 %v1211
        %v1332 = vpop.f32.mrf.mxu0
        %v1333 = vadd.f32 0.0, %v1332
        %v1334 = vpop.f32.mrf.mxu0
        %v1335 = vpop.f32.mrf.mxu0
        %v1336 = vadd.f32 0.0, %v1335
        %v1337 = vpop.f32.mrf.mxu0
        %1338 = vmatprep.mubr.bf16.mxu0 0
        %1339 = vmatmul.mubr.bf16.gmra.mxu0 %v1213
        %v1340 = vpop.f32.mrf.mxu0
        %v1341 = vadd.f32 0.0, %v1340
        %v1342 = vpop.f32.mrf.mxu0
        %v1343 = vpop.f32.mrf.mxu0
        %v1344 = vadd.f32 0.0, %v1343
        %v1345 = vpop.f32.mrf.mxu0
        %1346 = vmatprep.mubr.bf16.mxu0 0
        %1347 = vmatmul.mubr.bf16.gmra.mxu0 %v1215
        %v1348 = vpop.f32.mrf.mxu0
        %v1349 = vadd.f32 0.0, %v1348
        %v1350 = vpop.f32.mrf.mxu0
        %v1351 = vpop.f32.mrf.mxu0
        %v1352 = vadd.f32 0.0, %v1351
        %v1353 = vpop.f32.mrf.mxu0
        %1354 = vmatprep.mubr.bf16.mxu0 0
        %1355 = vmatmul.mubr.bf16.gmra.mxu0 %v1217
        %v1356 = vpop.f32.mrf.mxu0
        %v1357 = vadd.f32 0.0, %v1356
        %v1358 = vpop.f32.mrf.mxu0
        %v1359 = vpop.f32.mrf.mxu0
        %v1360 = vadd.f32 0.0, %v1359
        %v1361 = vpop.f32.mrf.mxu0
        %1362 = vmatprep.mubr.bf16.mxu0 0
        %1363 = vmatmul.mubr.bf16.gmra.mxu0 %v1219
        %v1364 = vpop.f32.mrf.mxu0
        %v1365 = vadd.f32 0.0, %v1364
        %v1366 = vpop.f32.mrf.mxu0
        %v1367 = vpop.f32.mrf.mxu0
        %v1368 = vadd.f32 0.0, %v1367
        %v1369 = vpop.f32.mrf.mxu0
        %1370 = vmatprep.mubr.bf16.mxu0 0
        %1371 = vmatmul.mubr.bf16.gmra.mxu0 %v1221
        %v1372 = vpop.f32.mrf.mxu0
        %v1373 = vadd.f32 0.0, %v1372
        %v1374 = vpop.f32.mrf.mxu0
        %v1375 = vpop.f32.mrf.mxu0
        %v1376 = vadd.f32 0.0, %v1375
        %v1377 = vpop.f32.mrf.mxu0
        %1378 = vmatprep.mubr.bf16.mxu0 0
        %1379 = vmatmul.mubr.bf16.gmra.mxu0 %v1223
        %v1380 = vpop.f32.mrf.mxu0
        %v1381 = vadd.f32 0.0, %v1380
        %v1382 = vpop.f32.mrf.mxu0
        %v1383 = vpop.f32.mrf.mxu0
        %v1384 = vadd.f32 0.0, %v1383
        %v1385 = vpop.f32.mrf.mxu0
        %1386 = vmatprep.mubr.bf16.mxu0 0
        %1387 = vmatmul.mubr.bf16.gmra.mxu0 %v1225
        %v1388 = vpop.f32.mrf.mxu0
        %v1389 = vadd.f32 0.0, %v1388
        %v1390 = vpop.f32.mrf.mxu0
        %v1391 = vpop.f32.mrf.mxu0
        %v1392 = vadd.f32 0.0, %v1391
        %v1393 = vpop.f32.mrf.mxu0
        %1394 = vdwg.mxu0
        %v1395 = vld [vmem:[%s2] sm:$0x1]
        %v1397 = vlaneseq
        %v1398 = vshrl.u32 %v1397, 7
        %v1399 = vsub.s32 0, %v1398
        %v1400 = vrot.slane %v1395, %v1399
        %v1402 = vmul.f32 %v1269, %v1400
        %v1403 = vmul.f32 %v1272, %v1400
        %v1404 = vmul.f32 %v1277, %v1400
        %v1405 = vmul.f32 %v1280, %v1400
        %v1406 = vmul.f32 %v1285, %v1400
        %v1407 = vmul.f32 %v1288, %v1400
        %v1408 = vmul.f32 %v1293, %v1400
        %v1409 = vmul.f32 %v1296, %v1400
        %v1410 = vmul.f32 %v1301, %v1400
        %v1411 = vmul.f32 %v1304, %v1400
        %v1412 = vmul.f32 %v1309, %v1400
        %v1413 = vmul.f32 %v1312, %v1400
        %v1414 = vmul.f32 %v1317, %v1400
        %v1415 = vmul.f32 %v1320, %v1400
        %v1416 = vmul.f32 %v1325, %v1400
        %v1417 = vmul.f32 %v1328, %v1400
        %v1418 = vmul.f32 %v1333, %v1400
        %v1419 = vmul.f32 %v1336, %v1400
        %v1420 = vmul.f32 %v1341, %v1400
        %v1421 = vmul.f32 %v1344, %v1400
        %v1422 = vmul.f32 %v1349, %v1400
        %v1423 = vmul.f32 %v1352, %v1400
        %v1424 = vmul.f32 %v1357, %v1400
        %v1425 = vmul.f32 %v1360, %v1400
        %v1426 = vmul.f32 %v1365, %v1400
        %v1427 = vmul.f32 %v1368, %v1400
        %v1428 = vmul.f32 %v1373, %v1400
        %v1429 = vmul.f32 %v1376, %v1400
        %v1430 = vmul.f32 %v1381, %v1400
        %v1431 = vmul.f32 %v1384, %v1400
        %v1432 = vmul.f32 %v1389, %v1400
        %v1433 = vmul.f32 %v1392, %v1400
        %v1434 = vld [vmem:[%s3] sm:$0x1]
        %v1436 = vlaneseq
        %v1437 = vshrl.u32 %v1436, 7
        %v1438 = vsub.s32 0, %v1437
        %v1439 = vrot.slane %v1434, %v1438
        %v1441 = vadd.f32 %v1402, %v1439
        %v1442 = vadd.f32 %v1403, %v1439
        %v1443 = vadd.f32 %v1404, %v1439
        %v1444 = vadd.f32 %v1405, %v1439
        %v1445 = vadd.f32 %v1406, %v1439
        %v1446 = vadd.f32 %v1407, %v1439
        %v1447 = vadd.f32 %v1408, %v1439
        %v1448 = vadd.f32 %v1409, %v1439
        %v1449 = vadd.f32 %v1410, %v1439
        %v1450 = vadd.f32 %v1411, %v1439
        %v1451 = vadd.f32 %v1412, %v1439
        %v1452 = vadd.f32 %v1413, %v1439
        %v1453 = vadd.f32 %v1414, %v1439
        %v1454 = vadd.f32 %v1415, %v1439
        %v1455 = vadd.f32 %v1416, %v1439
        %v1456 = vadd.f32 %v1417, %v1439
        %v1457 = vadd.f32 %v1418, %v1439
        %v1458 = vadd.f32 %v1419, %v1439
        %v1459 = vadd.f32 %v1420, %v1439
        %v1460 = vadd.f32 %v1421, %v1439
        %v1461 = vadd.f32 %v1422, %v1439
        %v1462 = vadd.f32 %v1423, %v1439
        %v1463 = vadd.f32 %v1424, %v1439
        %v1464 = vadd.f32 %v1425, %v1439
        %v1465 = vadd.f32 %v1426, %v1439
        %v1466 = vadd.f32 %v1427, %v1439
        %v1467 = vadd.f32 %v1428, %v1439
        %v1468 = vadd.f32 %v1429, %v1439
        %v1469 = vadd.f32 %v1430, %v1439
        %v1470 = vadd.f32 %v1431, %v1439
        %v1471 = vadd.f32 %v1432, %v1439
        %v1472 = vadd.f32 %v1433, %v1439
        %v1473 = vmax.f32 %v1441, 0.0
        %v1474 = vmax.f32 %v1442, 0.0
        %v1475 = vmax.f32 %v1443, 0.0
        %v1476 = vmax.f32 %v1444, 0.0
        %v1477 = vmax.f32 %v1445, 0.0
        %v1478 = vmax.f32 %v1446, 0.0
        %v1479 = vmax.f32 %v1447, 0.0
        %v1480 = vmax.f32 %v1448, 0.0
        %v1481 = vmax.f32 %v1449, 0.0
        %v1482 = vmax.f32 %v1450, 0.0
        %v1483 = vmax.f32 %v1451, 0.0
        %v1484 = vmax.f32 %v1452, 0.0
        %v1485 = vmax.f32 %v1453, 0.0
        %v1486 = vmax.f32 %v1454, 0.0
        %v1487 = vmax.f32 %v1455, 0.0
        %v1488 = vmax.f32 %v1456, 0.0
        %v1489 = vmax.f32 %v1457, 0.0
        %v1490 = vmax.f32 %v1458, 0.0
        %v1491 = vmax.f32 %v1459, 0.0
        %v1492 = vmax.f32 %v1460, 0.0
        %v1493 = vmax.f32 %v1461, 0.0
        %v1494 = vmax.f32 %v1462, 0.0
        %v1495 = vmax.f32 %v1463, 0.0
        %v1496 = vmax.f32 %v1464, 0.0
        %v1497 = vmax.f32 %v1465, 0.0
        %v1498 = vmax.f32 %v1466, 0.0
        %v1499 = vmax.f32 %v1467, 0.0
        %v1500 = vmax.f32 %v1468, 0.0
        %v1501 = vmax.f32 %v1469, 0.0
        %v1502 = vmax.f32 %v1470, 0.0
        %v1503 = vmax.f32 %v1471, 0.0
        %v1504 = vmax.f32 %v1472, 0.0
        %v1505 = vsel %vm1154, %v1473, -inf
        %v1506 = vsel %vm1154, %v1475, -inf
        %v1507 = vmax.f32 %v1505, %v1506
        %v1508 = vsel %vm1154, %v1474, -inf
        %v1509 = vsel %vm1154, %v1476, -inf
        %v1510 = vmax.f32 %v1508, %v1509
        %v1511 = vsel %vm1154, %v1477, -inf
        %v1512 = vsel %vm1154, %v1479, -inf
        %v1513 = vmax.f32 %v1511, %v1512
        %v1514 = vsel %vm1154, %v1478, -inf
        %v1515 = vsel %vm1154, %v1480, -inf
        %v1516 = vmax.f32 %v1514, %v1515
        %v1517 = vsel %vm1154, %v1481, -inf
        %v1518 = vsel %vm1154, %v1483, -inf
        %v1519 = vmax.f32 %v1517, %v1518
        %v1520 = vsel %vm1154, %v1482, -inf
        %v1521 = vsel %vm1154, %v1484, -inf
        %v1522 = vmax.f32 %v1520, %v1521
        %v1523 = vsel %vm1154, %v1485, -inf
        %v1524 = vsel %vm1154, %v1487, -inf
        %v1525 = vmax.f32 %v1523, %v1524
        %v1526 = vsel %vm1154, %v1486, -inf
        %v1527 = vsel %vm1154, %v1488, -inf
        %v1528 = vmax.f32 %v1526, %v1527
        %v1529 = vsel %vm1154, %v1489, -inf
        %v1530 = vsel %vm1154, %v1491, -inf
        %v1531 = vmax.f32 %v1529, %v1530
        %v1532 = vsel %vm1154, %v1490, -inf
        %v1533 = vsel %vm1154, %v1492, -inf
        %v1534 = vmax.f32 %v1532, %v1533
        %v1535 = vsel %vm1154, %v1493, -inf
        %v1536 = vsel %vm1154, %v1495, -inf
        %v1537 = vmax.f32 %v1535, %v1536
        %v1538 = vsel %vm1154, %v1494, -inf
        %v1539 = vsel %vm1154, %v1496, -inf
        %v1540 = vmax.f32 %v1538, %v1539
        %v1541 = vsel %vm1154, %v1497, -inf
        %v1542 = vsel %vm1154, %v1499, -inf
        %v1543 = vmax.f32 %v1541, %v1542
        %v1544 = vsel %vm1154, %v1498, -inf
        %v1545 = vsel %vm1154, %v1500, -inf
        %v1546 = vmax.f32 %v1544, %v1545
        %v1547 = vsel %vm1154, %v1501, -inf
        %v1548 = vsel %vm1154, %v1503, -inf
        %v1549 = vmax.f32 %v1547, %v1548
        %v1550 = vsel %vm1154, %v1502, -inf
        %v1551 = vsel %vm1154, %v1504, -inf
        %v1552 = vmax.f32 %v1550, %v1551
        %v1569 = vcombine.high %v1507, %v1507
        %v1571 = vunpack.c.l.s4 1983009808
        %v1572 = vunpack.c.0.s8 %v1571
        %v1573 = vlaneseq
        %v1574 = vshrl.u32 %v1573, 7
        %v1575 = vsub.s32 %v1572, %v1574
        %v1576 = vrot.slane %v1507, %v1575
        %v1578 = vunpack.c.l.s4 1983009808
        %v1579 = vunpack.c.0.s8 %v1578
        %v1580 = vlaneseq
        %v1581 = vshrl.u32 %v1580, 7
        %v1582 = vsub.s32 %v1579, %v1581
        %v1583 = vrot.slane %v1569, %v1582
        %v1584 = vcombine.high %v1576, %v1576
        %v1585 = vcombine.high %v1583, %v1583
        %v1586 = vcombine.high %v1510, %v1510
        %v1588 = vunpack.c.l.s4 1983009808
        %v1589 = vunpack.c.0.s8 %v1588
        %v1590 = vlaneseq
        %v1591 = vshrl.u32 %v1590, 7
        %v1592 = vsub.s32 %v1589, %v1591
        %v1593 = vrot.slane %v1510, %v1592
        %v1595 = vunpack.c.l.s4 1983009808
        %v1596 = vunpack.c.0.s8 %v1595
        %v1597 = vlaneseq
        %v1598 = vshrl.u32 %v1597, 7
        %v1599 = vsub.s32 %v1596, %v1598
        %v1600 = vrot.slane %v1586, %v1599
        %v1601 = vcombine.high %v1593, %v1593
        %v1602 = vcombine.high %v1600, %v1600
        %v1603 = vcombine.high %v1513, %v1513
        %v1605 = vunpack.c.l.s4 1983009808
        %v1606 = vunpack.c.0.s8 %v1605
        %v1607 = vlaneseq
        %v1608 = vshrl.u32 %v1607, 7
        %v1609 = vsub.s32 %v1606, %v1608
        %v1610 = vrot.slane %v1513, %v1609
        %v1612 = vunpack.c.l.s4 1983009808
        %v1613 = vunpack.c.0.s8 %v1612
        %v1614 = vlaneseq
        %v1615 = vshrl.u32 %v1614, 7
        %v1616 = vsub.s32 %v1613, %v1615
        %v1617 = vrot.slane %v1603, %v1616
        %v1618 = vcombine.high %v1610, %v1610
        %v1619 = vcombine.high %v1617, %v1617
        %v1620 = vcombine.high %v1516, %v1516
        %v1622 = vunpack.c.l.s4 1983009808
        %v1623 = vunpack.c.0.s8 %v1622
        %v1624 = vlaneseq
        %v1625 = vshrl.u32 %v1624, 7
        %v1626 = vsub.s32 %v1623, %v1625
        %v1627 = vrot.slane %v1516, %v1626
        %v1629 = vunpack.c.l.s4 1983009808
        %v1630 = vunpack.c.0.s8 %v1629
        %v1631 = vlaneseq
        %v1632 = vshrl.u32 %v1631, 7
        %v1633 = vsub.s32 %v1630, %v1632
        %v1634 = vrot.slane %v1620, %v1633
        %v1635 = vcombine.high %v1627, %v1627
        %v1636 = vcombine.high %v1634, %v1634
        %v1637 = vcombine.high %v1519, %v1519
        %v1639 = vunpack.c.l.s4 1983009808
        %v1640 = vunpack.c.0.s8 %v1639
        %v1641 = vlaneseq
        %v1642 = vshrl.u32 %v1641, 7
        %v1643 = vsub.s32 %v1640, %v1642
        %v1644 = vrot.slane %v1519, %v1643
        %v1646 = vunpack.c.l.s4 1983009808
        %v1647 = vunpack.c.0.s8 %v1646
        %v1648 = vlaneseq
        %v1649 = vshrl.u32 %v1648, 7
        %v1650 = vsub.s32 %v1647, %v1649
        %v1651 = vrot.slane %v1637, %v1650
        %v1652 = vcombine.high %v1644, %v1644
        %v1653 = vcombine.high %v1651, %v1651
        %v1654 = vcombine.high %v1522, %v1522
        %v1656 = vunpack.c.l.s4 1983009808
        %v1657 = vunpack.c.0.s8 %v1656
        %v1658 = vlaneseq
        %v1659 = vshrl.u32 %v1658, 7
        %v1660 = vsub.s32 %v1657, %v1659
        %v1661 = vrot.slane %v1522, %v1660
        %v1663 = vunpack.c.l.s4 1983009808
        %v1664 = vunpack.c.0.s8 %v1663
        %v1665 = vlaneseq
        %v1666 = vshrl.u32 %v1665, 7
        %v1667 = vsub.s32 %v1664, %v1666
        %v1668 = vrot.slane %v1654, %v1667
        %v1669 = vcombine.high %v1661, %v1661
        %v1670 = vcombine.high %v1668, %v1668
        %v1671 = vcombine.high %v1525, %v1525
        %v1673 = vunpack.c.l.s4 1983009808
        %v1674 = vunpack.c.0.s8 %v1673
        %v1675 = vlaneseq
        %v1676 = vshrl.u32 %v1675, 7
        %v1677 = vsub.s32 %v1674, %v1676
        %v1678 = vrot.slane %v1525, %v1677
        %v1680 = vunpack.c.l.s4 1983009808
        %v1681 = vunpack.c.0.s8 %v1680
        %v1682 = vlaneseq
        %v1683 = vshrl.u32 %v1682, 7
        %v1684 = vsub.s32 %v1681, %v1683
        %v1685 = vrot.slane %v1671, %v1684
        %v1686 = vcombine.high %v1678, %v1678
        %v1687 = vcombine.high %v1685, %v1685
        %v1688 = vcombine.high %v1528, %v1528
        %v1690 = vunpack.c.l.s4 1983009808
        %v1691 = vunpack.c.0.s8 %v1690
        %v1692 = vlaneseq
        %v1693 = vshrl.u32 %v1692, 7
        %v1694 = vsub.s32 %v1691, %v1693
        %v1695 = vrot.slane %v1528, %v1694
        %v1697 = vunpack.c.l.s4 1983009808
        %v1698 = vunpack.c.0.s8 %v1697
        %v1699 = vlaneseq
        %v1700 = vshrl.u32 %v1699, 7
        %v1701 = vsub.s32 %v1698, %v1700
        %v1702 = vrot.slane %v1688, %v1701
        %v1703 = vcombine.high %v1695, %v1695
        %v1704 = vcombine.high %v1702, %v1702
        %v1705 = vcombine.high %v1531, %v1531
        %v1707 = vunpack.c.l.s4 1983009808
        %v1708 = vunpack.c.0.s8 %v1707
        %v1709 = vlaneseq
        %v1710 = vshrl.u32 %v1709, 7
        %v1711 = vsub.s32 %v1708, %v1710
        %v1712 = vrot.slane %v1531, %v1711
        %v1714 = vunpack.c.l.s4 1983009808
        %v1715 = vunpack.c.0.s8 %v1714
        %v1716 = vlaneseq
        %v1717 = vshrl.u32 %v1716, 7
        %v1718 = vsub.s32 %v1715, %v1717
        %v1719 = vrot.slane %v1705, %v1718
        %v1720 = vcombine.high %v1712, %v1712
        %v1721 = vcombine.high %v1719, %v1719
        %v1722 = vcombine.high %v1534, %v1534
        %v1724 = vunpack.c.l.s4 1983009808
        %v1725 = vunpack.c.0.s8 %v1724
        %v1726 = vlaneseq
        %v1727 = vshrl.u32 %v1726, 7
        %v1728 = vsub.s32 %v1725, %v1727
        %v1729 = vrot.slane %v1534, %v1728
        %v1731 = vunpack.c.l.s4 1983009808
        %v1732 = vunpack.c.0.s8 %v1731
        %v1733 = vlaneseq
        %v1734 = vshrl.u32 %v1733, 7
        %v1735 = vsub.s32 %v1732, %v1734
        %v1736 = vrot.slane %v1722, %v1735
        %v1737 = vcombine.high %v1729, %v1729
        %v1738 = vcombine.high %v1736, %v1736
        %v1739 = vcombine.high %v1537, %v1537
        %v1741 = vunpack.c.l.s4 1983009808
        %v1742 = vunpack.c.0.s8 %v1741
        %v1743 = vlaneseq
        %v1744 = vshrl.u32 %v1743, 7
        %v1745 = vsub.s32 %v1742, %v1744
        %v1746 = vrot.slane %v1537, %v1745
        %v1748 = vunpack.c.l.s4 1983009808
        %v1749 = vunpack.c.0.s8 %v1748
        %v1750 = vlaneseq
        %v1751 = vshrl.u32 %v1750, 7
        %v1752 = vsub.s32 %v1749, %v1751
        %v1753 = vrot.slane %v1739, %v1752
        %v1754 = vcombine.high %v1746, %v1746
        %v1755 = vcombine.high %v1753, %v1753
        %v1756 = vcombine.high %v1540, %v1540
        %v1758 = vunpack.c.l.s4 1983009808
        %v1759 = vunpack.c.0.s8 %v1758
        %v1760 = vlaneseq
        %v1761 = vshrl.u32 %v1760, 7
        %v1762 = vsub.s32 %v1759, %v1761
        %v1763 = vrot.slane %v1540, %v1762
        %v1765 = vunpack.c.l.s4 1983009808
        %v1766 = vunpack.c.0.s8 %v1765
        %v1767 = vlaneseq
        %v1768 = vshrl.u32 %v1767, 7
        %v1769 = vsub.s32 %v1766, %v1768
        %v1770 = vrot.slane %v1756, %v1769
        %v1771 = vcombine.high %v1763, %v1763
        %v1772 = vcombine.high %v1770, %v1770
        %v1773 = vcombine.high %v1543, %v1543
        %v1775 = vunpack.c.l.s4 1983009808
        %v1776 = vunpack.c.0.s8 %v1775
        %v1777 = vlaneseq
        %v1778 = vshrl.u32 %v1777, 7
        %v1779 = vsub.s32 %v1776, %v1778
        %v1780 = vrot.slane %v1543, %v1779
        %v1782 = vunpack.c.l.s4 1983009808
        %v1783 = vunpack.c.0.s8 %v1782
        %v1784 = vlaneseq
        %v1785 = vshrl.u32 %v1784, 7
        %v1786 = vsub.s32 %v1783, %v1785
        %v1787 = vrot.slane %v1773, %v1786
        %v1788 = vcombine.high %v1780, %v1780
        %v1789 = vcombine.high %v1787, %v1787
        %v1790 = vcombine.high %v1546, %v1546
        %v1792 = vunpack.c.l.s4 1983009808
        %v1793 = vunpack.c.0.s8 %v1792
        %v1794 = vlaneseq
        %v1795 = vshrl.u32 %v1794, 7
        %v1796 = vsub.s32 %v1793, %v1795
        %v1797 = vrot.slane %v1546, %v1796
        %v1799 = vunpack.c.l.s4 1983009808
        %v1800 = vunpack.c.0.s8 %v1799
        %v1801 = vlaneseq
        %v1802 = vshrl.u32 %v1801, 7
        %v1803 = vsub.s32 %v1800, %v1802
        %v1804 = vrot.slane %v1790, %v1803
        %v1805 = vcombine.high %v1797, %v1797
        %v1806 = vcombine.high %v1804, %v1804
        %v1807 = vcombine.high %v1549, %v1549
        %v1809 = vunpack.c.l.s4 1983009808
        %v1810 = vunpack.c.0.s8 %v1809
        %v1811 = vlaneseq
        %v1812 = vshrl.u32 %v1811, 7
        %v1813 = vsub.s32 %v1810, %v1812
        %v1814 = vrot.slane %v1549, %v1813
        %v1816 = vunpack.c.l.s4 1983009808
        %v1817 = vunpack.c.0.s8 %v1816
        %v1818 = vlaneseq
        %v1819 = vshrl.u32 %v1818, 7
        %v1820 = vsub.s32 %v1817, %v1819
        %v1821 = vrot.slane %v1807, %v1820
        %v1822 = vcombine.high %v1814, %v1814
        %v1823 = vcombine.high %v1821, %v1821
        %v1824 = vcombine.high %v1552, %v1552
        %v1826 = vunpack.c.l.s4 1983009808
        %v1827 = vunpack.c.0.s8 %v1826
        %v1828 = vlaneseq
        %v1829 = vshrl.u32 %v1828, 7
        %v1830 = vsub.s32 %v1827, %v1829
        %v1831 = vrot.slane %v1552, %v1830
        %v1833 = vunpack.c.l.s4 1983009808
        %v1834 = vunpack.c.0.s8 %v1833
        %v1835 = vlaneseq
        %v1836 = vshrl.u32 %v1835, 7
        %v1837 = vsub.s32 %v1834, %v1836
        %v1838 = vrot.slane %v1824, %v1837
        %v1839 = vcombine.high %v1831, %v1831
        %v1840 = vcombine.high %v1838, %v1838
        %vm1905 = vcmask 58368
        %v1906 = vsel %vm1905, %v1576, -inf
        %v1907 = vrot.slane %v1906, 4
        %v1908 = vmax.f32 %v1906, %v1907
        %v1909 = vrot.slane %v1908, 2
        %v1910 = vmax.f32 %v1908, %v1909
        %v1911 = vrot.slane %v1910, 1
        %v1912 = vmax.f32 %v1910, %v1911
        %v1913 = vsel %vm1905, %v1584, -inf
        %v1914 = vrot.slane %v1913, 4
        %v1915 = vmax.f32 %v1913, %v1914
        %v1916 = vrot.slane %v1915, 2
        %v1917 = vmax.f32 %v1915, %v1916
        %v1918 = vrot.slane %v1917, 1
        %v1919 = vmax.f32 %v1917, %v1918
        %v1920 = vsel %vm1905, %v1583, -inf
        %v1921 = vrot.slane %v1920, 4
        %v1922 = vmax.f32 %v1920, %v1921
        %v1923 = vrot.slane %v1922, 2
        %v1924 = vmax.f32 %v1922, %v1923
        %v1925 = vrot.slane %v1924, 1
        %v1926 = vmax.f32 %v1924, %v1925
        %v1927 = vsel %vm1905, %v1585, -inf
        %v1928 = vrot.slane %v1927, 4
        %v1929 = vmax.f32 %v1927, %v1928
        %v1930 = vrot.slane %v1929, 2
        %v1931 = vmax.f32 %v1929, %v1930
        %v1932 = vrot.slane %v1931, 1
        %v1933 = vmax.f32 %v1931, %v1932
        %v1934 = vsel %vm1905, %v1593, -inf
        %v1935 = vrot.slane %v1934, 4
        %v1936 = vmax.f32 %v1934, %v1935
        %v1937 = vrot.slane %v1936, 2
        %v1938 = vmax.f32 %v1936, %v1937
        %v1939 = vrot.slane %v1938, 1
        %v1940 = vmax.f32 %v1938, %v1939
        %v1941 = vsel %vm1905, %v1601, -inf
        %v1942 = vrot.slane %v1941, 4
        %v1943 = vmax.f32 %v1941, %v1942
        %v1944 = vrot.slane %v1943, 2
        %v1945 = vmax.f32 %v1943, %v1944
        %v1946 = vrot.slane %v1945, 1
        %v1947 = vmax.f32 %v1945, %v1946
        %v1948 = vsel %vm1905, %v1600, -inf
        %v1949 = vrot.slane %v1948, 4
        %v1950 = vmax.f32 %v1948, %v1949
        %v1951 = vrot.slane %v1950, 2
        %v1952 = vmax.f32 %v1950, %v1951
        %v1953 = vrot.slane %v1952, 1
        %v1954 = vmax.f32 %v1952, %v1953
        %v1955 = vsel %vm1905, %v1602, -inf
        %v1956 = vrot.slane %v1955, 4
        %v1957 = vmax.f32 %v1955, %v1956
        %v1958 = vrot.slane %v1957, 2
        %v1959 = vmax.f32 %v1957, %v1958
        %v1960 = vrot.slane %v1959, 1
        %v1961 = vmax.f32 %v1959, %v1960
        %v1962 = vsel %vm1905, %v1610, -inf
        %v1963 = vrot.slane %v1962, 4
        %v1964 = vmax.f32 %v1962, %v1963
        %v1965 = vrot.slane %v1964, 2
        %v1966 = vmax.f32 %v1964, %v1965
        %v1967 = vrot.slane %v1966, 1
        %v1968 = vmax.f32 %v1966, %v1967
        %v1969 = vsel %vm1905, %v1618, -inf
        %v1970 = vrot.slane %v1969, 4
        %v1971 = vmax.f32 %v1969, %v1970
        %v1972 = vrot.slane %v1971, 2
        %v1973 = vmax.f32 %v1971, %v1972
        %v1974 = vrot.slane %v1973, 1
        %v1975 = vmax.f32 %v1973, %v1974
        %v1976 = vsel %vm1905, %v1617, -inf
        %v1977 = vrot.slane %v1976, 4
        %v1978 = vmax.f32 %v1976, %v1977
        %v1979 = vrot.slane %v1978, 2
        %v1980 = vmax.f32 %v1978, %v1979
        %v1981 = vrot.slane %v1980, 1
        %v1982 = vmax.f32 %v1980, %v1981
        %v1983 = vsel %vm1905, %v1619, -inf
        %v1984 = vrot.slane %v1983, 4
        %v1985 = vmax.f32 %v1983, %v1984
        %v1986 = vrot.slane %v1985, 2
        %v1987 = vmax.f32 %v1985, %v1986
        %v1988 = vrot.slane %v1987, 1
        %v1989 = vmax.f32 %v1987, %v1988
        %v1990 = vsel %vm1905, %v1627, -inf
        %v1991 = vrot.slane %v1990, 4
        %v1992 = vmax.f32 %v1990, %v1991
        %v1993 = vrot.slane %v1992, 2
        %v1994 = vmax.f32 %v1992, %v1993
        %v1995 = vrot.slane %v1994, 1
        %v1996 = vmax.f32 %v1994, %v1995
        %v1997 = vsel %vm1905, %v1635, -inf
        %v1998 = vrot.slane %v1997, 4
        %v1999 = vmax.f32 %v1997, %v1998
        %v2000 = vrot.slane %v1999, 2
        %v2001 = vmax.f32 %v1999, %v2000
        %v2002 = vrot.slane %v2001, 1
        %v2003 = vmax.f32 %v2001, %v2002
        %v2004 = vsel %vm1905, %v1634, -inf
        %v2005 = vrot.slane %v2004, 4
        %v2006 = vmax.f32 %v2004, %v2005
        %v2007 = vrot.slane %v2006, 2
        %v2008 = vmax.f32 %v2006, %v2007
        %v2009 = vrot.slane %v2008, 1
        %v2010 = vmax.f32 %v2008, %v2009
        %v2011 = vsel %vm1905, %v1636, -inf
        %v2012 = vrot.slane %v2011, 4
        %v2013 = vmax.f32 %v2011, %v2012
        %v2014 = vrot.slane %v2013, 2
        %v2015 = vmax.f32 %v2013, %v2014
        %v2016 = vrot.slane %v2015, 1
        %v2017 = vmax.f32 %v2015, %v2016
        %v2018 = vsel %vm1905, %v1644, -inf
        %v2019 = vrot.slane %v2018, 4
        %v2020 = vmax.f32 %v2018, %v2019
        %v2021 = vrot.slane %v2020, 2
        %v2022 = vmax.f32 %v2020, %v2021
        %v2023 = vrot.slane %v2022, 1
        %v2024 = vmax.f32 %v2022, %v2023
        %v2025 = vsel %vm1905, %v1652, -inf
        %v2026 = vrot.slane %v2025, 4
        %v2027 = vmax.f32 %v2025, %v2026
        %v2028 = vrot.slane %v2027, 2
        %v2029 = vmax.f32 %v2027, %v2028
        %v2030 = vrot.slane %v2029, 1
        %v2031 = vmax.f32 %v2029, %v2030
        %v2032 = vsel %vm1905, %v1651, -inf
        %v2033 = vrot.slane %v2032, 4
        %v2034 = vmax.f32 %v2032, %v2033
        %v2035 = vrot.slane %v2034, 2
        %v2036 = vmax.f32 %v2034, %v2035
        %v2037 = vrot.slane %v2036, 1
        %v2038 = vmax.f32 %v2036, %v2037
        %v2039 = vsel %vm1905, %v1653, -inf
        %v2040 = vrot.slane %v2039, 4
        %v2041 = vmax.f32 %v2039, %v2040
        %v2042 = vrot.slane %v2041, 2
        %v2043 = vmax.f32 %v2041, %v2042
        %v2044 = vrot.slane %v2043, 1
        %v2045 = vmax.f32 %v2043, %v2044
        %v2046 = vsel %vm1905, %v1661, -inf
        %v2047 = vrot.slane %v2046, 4
        %v2048 = vmax.f32 %v2046, %v2047
        %v2049 = vrot.slane %v2048, 2
        %v2050 = vmax.f32 %v2048, %v2049
        %v2051 = vrot.slane %v2050, 1
        %v2052 = vmax.f32 %v2050, %v2051
        %v2053 = vsel %vm1905, %v1669, -inf
        %v2054 = vrot.slane %v2053, 4
        %v2055 = vmax.f32 %v2053, %v2054
        %v2056 = vrot.slane %v2055, 2
        %v2057 = vmax.f32 %v2055, %v2056
        %v2058 = vrot.slane %v2057, 1
        %v2059 = vmax.f32 %v2057, %v2058
        %v2060 = vsel %vm1905, %v1668, -inf
        %v2061 = vrot.slane %v2060, 4
        %v2062 = vmax.f32 %v2060, %v2061
        %v2063 = vrot.slane %v2062, 2
        %v2064 = vmax.f32 %v2062, %v2063
        %v2065 = vrot.slane %v2064, 1
        %v2066 = vmax.f32 %v2064, %v2065
        %v2067 = vsel %vm1905, %v1670, -inf
        %v2068 = vrot.slane %v2067, 4
        %v2069 = vmax.f32 %v2067, %v2068
        %v2070 = vrot.slane %v2069, 2
        %v2071 = vmax.f32 %v2069, %v2070
        %v2072 = vrot.slane %v2071, 1
        %v2073 = vmax.f32 %v2071, %v2072
        %v2074 = vsel %vm1905, %v1678, -inf
        %v2075 = vrot.slane %v2074, 4
        %v2076 = vmax.f32 %v2074, %v2075
        %v2077 = vrot.slane %v2076, 2
        %v2078 = vmax.f32 %v2076, %v2077
        %v2079 = vrot.slane %v2078, 1
        %v2080 = vmax.f32 %v2078, %v2079
        %v2081 = vsel %vm1905, %v1686, -inf
        %v2082 = vrot.slane %v2081, 4
        %v2083 = vmax.f32 %v2081, %v2082
        %v2084 = vrot.slane %v2083, 2
        %v2085 = vmax.f32 %v2083, %v2084
        %v2086 = vrot.slane %v2085, 1
        %v2087 = vmax.f32 %v2085, %v2086
        %v2088 = vsel %vm1905, %v1685, -inf
        %v2089 = vrot.slane %v2088, 4
        %v2090 = vmax.f32 %v2088, %v2089
        %v2091 = vrot.slane %v2090, 2
        %v2092 = vmax.f32 %v2090, %v2091
        %v2093 = vrot.slane %v2092, 1
        %v2094 = vmax.f32 %v2092, %v2093
        %v2095 = vsel %vm1905, %v1687, -inf
        %v2096 = vrot.slane %v2095, 4
        %v2097 = vmax.f32 %v2095, %v2096
        %v2098 = vrot.slane %v2097, 2
        %v2099 = vmax.f32 %v2097, %v2098
        %v2100 = vrot.slane %v2099, 1
        %v2101 = vmax.f32 %v2099, %v2100
        %v2102 = vsel %vm1905, %v1695, -inf
        %v2103 = vrot.slane %v2102, 4
        %v2104 = vmax.f32 %v2102, %v2103
        %v2105 = vrot.slane %v2104, 2
        %v2106 = vmax.f32 %v2104, %v2105
        %v2107 = vrot.slane %v2106, 1
        %v2108 = vmax.f32 %v2106, %v2107
        %v2109 = vsel %vm1905, %v1703, -inf
        %v2110 = vrot.slane %v2109, 4
        %v2111 = vmax.f32 %v2109, %v2110
        %v2112 = vrot.slane %v2111, 2
        %v2113 = vmax.f32 %v2111, %v2112
        %v2114 = vrot.slane %v2113, 1
        %v2115 = vmax.f32 %v2113, %v2114
        %v2116 = vsel %vm1905, %v1702, -inf
        %v2117 = vrot.slane %v2116, 4
        %v2118 = vmax.f32 %v2116, %v2117
        %v2119 = vrot.slane %v2118, 2
        %v2120 = vmax.f32 %v2118, %v2119
        %v2121 = vrot.slane %v2120, 1
        %v2122 = vmax.f32 %v2120, %v2121
        %v2123 = vsel %vm1905, %v1704, -inf
        %v2124 = vrot.slane %v2123, 4
        %v2125 = vmax.f32 %v2123, %v2124
        %v2126 = vrot.slane %v2125, 2
        %v2127 = vmax.f32 %v2125, %v2126
        %v2128 = vrot.slane %v2127, 1
        %v2129 = vmax.f32 %v2127, %v2128
        %v2130 = vsel %vm1905, %v1712, -inf
        %v2131 = vrot.slane %v2130, 4
        %v2132 = vmax.f32 %v2130, %v2131
        %v2133 = vrot.slane %v2132, 2
        %v2134 = vmax.f32 %v2132, %v2133
        %v2135 = vrot.slane %v2134, 1
        %v2136 = vmax.f32 %v2134, %v2135
        %v2137 = vsel %vm1905, %v1720, -inf
        %v2138 = vrot.slane %v2137, 4
        %v2139 = vmax.f32 %v2137, %v2138
        %v2140 = vrot.slane %v2139, 2
        %v2141 = vmax.f32 %v2139, %v2140
        %v2142 = vrot.slane %v2141, 1
        %v2143 = vmax.f32 %v2141, %v2142
        %v2144 = vsel %vm1905, %v1719, -inf
        %v2145 = vrot.slane %v2144, 4
        %v2146 = vmax.f32 %v2144, %v2145
        %v2147 = vrot.slane %v2146, 2
        %v2148 = vmax.f32 %v2146, %v2147
        %v2149 = vrot.slane %v2148, 1
        %v2150 = vmax.f32 %v2148, %v2149
        %v2151 = vsel %vm1905, %v1721, -inf
        %v2152 = vrot.slane %v2151, 4
        %v2153 = vmax.f32 %v2151, %v2152
        %v2154 = vrot.slane %v2153, 2
        %v2155 = vmax.f32 %v2153, %v2154
        %v2156 = vrot.slane %v2155, 1
        %v2157 = vmax.f32 %v2155, %v2156
        %v2158 = vsel %vm1905, %v1729, -inf
        %v2159 = vrot.slane %v2158, 4
        %v2160 = vmax.f32 %v2158, %v2159
        %v2161 = vrot.slane %v2160, 2
        %v2162 = vmax.f32 %v2160, %v2161
        %v2163 = vrot.slane %v2162, 1
        %v2164 = vmax.f32 %v2162, %v2163
        %v2165 = vsel %vm1905, %v1737, -inf
        %v2166 = vrot.slane %v2165, 4
        %v2167 = vmax.f32 %v2165, %v2166
        %v2168 = vrot.slane %v2167, 2
        %v2169 = vmax.f32 %v2167, %v2168
        %v2170 = vrot.slane %v2169, 1
        %v2171 = vmax.f32 %v2169, %v2170
        %v2172 = vsel %vm1905, %v1736, -inf
        %v2173 = vrot.slane %v2172, 4
        %v2174 = vmax.f32 %v2172, %v2173
        %v2175 = vrot.slane %v2174, 2
        %v2176 = vmax.f32 %v2174, %v2175
        %v2177 = vrot.slane %v2176, 1
        %v2178 = vmax.f32 %v2176, %v2177
        %v2179 = vsel %vm1905, %v1738, -inf
        %v2180 = vrot.slane %v2179, 4
        %v2181 = vmax.f32 %v2179, %v2180
        %v2182 = vrot.slane %v2181, 2
        %v2183 = vmax.f32 %v2181, %v2182
        %v2184 = vrot.slane %v2183, 1
        %v2185 = vmax.f32 %v2183, %v2184
        %v2186 = vsel %vm1905, %v1746, -inf
        %v2187 = vrot.slane %v2186, 4
        %v2188 = vmax.f32 %v2186, %v2187
        %v2189 = vrot.slane %v2188, 2
        %v2190 = vmax.f32 %v2188, %v2189
        %v2191 = vrot.slane %v2190, 1
        %v2192 = vmax.f32 %v2190, %v2191
        %v2193 = vsel %vm1905, %v1754, -inf
        %v2194 = vrot.slane %v2193, 4
        %v2195 = vmax.f32 %v2193, %v2194
        %v2196 = vrot.slane %v2195, 2
        %v2197 = vmax.f32 %v2195, %v2196
        %v2198 = vrot.slane %v2197, 1
        %v2199 = vmax.f32 %v2197, %v2198
        %v2200 = vsel %vm1905, %v1753, -inf
        %v2201 = vrot.slane %v2200, 4
        %v2202 = vmax.f32 %v2200, %v2201
        %v2203 = vrot.slane %v2202, 2
        %v2204 = vmax.f32 %v2202, %v2203
        %v2205 = vrot.slane %v2204, 1
        %v2206 = vmax.f32 %v2204, %v2205
        %v2207 = vsel %vm1905, %v1755, -inf
        %v2208 = vrot.slane %v2207, 4
        %v2209 = vmax.f32 %v2207, %v2208
        %v2210 = vrot.slane %v2209, 2
        %v2211 = vmax.f32 %v2209, %v2210
        %v2212 = vrot.slane %v2211, 1
        %v2213 = vmax.f32 %v2211, %v2212
        %v2214 = vsel %vm1905, %v1763, -inf
        %v2215 = vrot.slane %v2214, 4
        %v2216 = vmax.f32 %v2214, %v2215
        %v2217 = vrot.slane %v2216, 2
        %v2218 = vmax.f32 %v2216, %v2217
        %v2219 = vrot.slane %v2218, 1
        %v2220 = vmax.f32 %v2218, %v2219
        %v2221 = vsel %vm1905, %v1771, -inf
        %v2222 = vrot.slane %v2221, 4
        %v2223 = vmax.f32 %v2221, %v2222
        %v2224 = vrot.slane %v2223, 2
        %v2225 = vmax.f32 %v2223, %v2224
        %v2226 = vrot.slane %v2225, 1
        %v2227 = vmax.f32 %v2225, %v2226
        %v2228 = vsel %vm1905, %v1770, -inf
        %v2229 = vrot.slane %v2228, 4
        %v2230 = vmax.f32 %v2228, %v2229
        %v2231 = vrot.slane %v2230, 2
        %v2232 = vmax.f32 %v2230, %v2231
        %v2233 = vrot.slane %v2232, 1
        %v2234 = vmax.f32 %v2232, %v2233
        %v2235 = vsel %vm1905, %v1772, -inf
        %v2236 = vrot.slane %v2235, 4
        %v2237 = vmax.f32 %v2235, %v2236
        %v2238 = vrot.slane %v2237, 2
        %v2239 = vmax.f32 %v2237, %v2238
        %v2240 = vrot.slane %v2239, 1
        %v2241 = vmax.f32 %v2239, %v2240
        %v2242 = vsel %vm1905, %v1780, -inf
        %v2243 = vrot.slane %v2242, 4
        %v2244 = vmax.f32 %v2242, %v2243
        %v2245 = vrot.slane %v2244, 2
        %v2246 = vmax.f32 %v2244, %v2245
        %v2247 = vrot.slane %v2246, 1
        %v2248 = vmax.f32 %v2246, %v2247
        %v2249 = vsel %vm1905, %v1788, -inf
        %v2250 = vrot.slane %v2249, 4
        %v2251 = vmax.f32 %v2249, %v2250
        %v2252 = vrot.slane %v2251, 2
        %v2253 = vmax.f32 %v2251, %v2252
        %v2254 = vrot.slane %v2253, 1
        %v2255 = vmax.f32 %v2253, %v2254
        %v2256 = vsel %vm1905, %v1787, -inf
        %v2257 = vrot.slane %v2256, 4
        %v2258 = vmax.f32 %v2256, %v2257
        %v2259 = vrot.slane %v2258, 2
        %v2260 = vmax.f32 %v2258, %v2259
        %v2261 = vrot.slane %v2260, 1
        %v2262 = vmax.f32 %v2260, %v2261
        %v2263 = vsel %vm1905, %v1789, -inf
        %v2264 = vrot.slane %v2263, 4
        %v2265 = vmax.f32 %v2263, %v2264
        %v2266 = vrot.slane %v2265, 2
        %v2267 = vmax.f32 %v2265, %v2266
        %v2268 = vrot.slane %v2267, 1
        %v2269 = vmax.f32 %v2267, %v2268
        %v2270 = vsel %vm1905, %v1797, -inf
        %v2271 = vrot.slane %v2270, 4
        %v2272 = vmax.f32 %v2270, %v2271
        %v2273 = vrot.slane %v2272, 2
        %v2274 = vmax.f32 %v2272, %v2273
        %v2275 = vrot.slane %v2274, 1
        %v2276 = vmax.f32 %v2274, %v2275
        %v2277 = vsel %vm1905, %v1805, -inf
        %v2278 = vrot.slane %v2277, 4
        %v2279 = vmax.f32 %v2277, %v2278
        %v2280 = vrot.slane %v2279, 2
        %v2281 = vmax.f32 %v2279, %v2280
        %v2282 = vrot.slane %v2281, 1
        %v2283 = vmax.f32 %v2281, %v2282
        %v2284 = vsel %vm1905, %v1804, -inf
        %v2285 = vrot.slane %v2284, 4
        %v2286 = vmax.f32 %v2284, %v2285
        %v2287 = vrot.slane %v2286, 2
        %v2288 = vmax.f32 %v2286, %v2287
        %v2289 = vrot.slane %v2288, 1
        %v2290 = vmax.f32 %v2288, %v2289
        %v2291 = vsel %vm1905, %v1806, -inf
        %v2292 = vrot.slane %v2291, 4
        %v2293 = vmax.f32 %v2291, %v2292
        %v2294 = vrot.slane %v2293, 2
        %v2295 = vmax.f32 %v2293, %v2294
        %v2296 = vrot.slane %v2295, 1
        %v2297 = vmax.f32 %v2295, %v2296
        %v2298 = vsel %vm1905, %v1814, -inf
        %v2299 = vrot.slane %v2298, 4
        %v2300 = vmax.f32 %v2298, %v2299
        %v2301 = vrot.slane %v2300, 2
        %v2302 = vmax.f32 %v2300, %v2301
        %v2303 = vrot.slane %v2302, 1
        %v2304 = vmax.f32 %v2302, %v2303
        %v2305 = vsel %vm1905, %v1822, -inf
        %v2306 = vrot.slane %v2305, 4
        %v2307 = vmax.f32 %v2305, %v2306
        %v2308 = vrot.slane %v2307, 2
        %v2309 = vmax.f32 %v2307, %v2308
        %v2310 = vrot.slane %v2309, 1
        %v2311 = vmax.f32 %v2309, %v2310
        %v2312 = vsel %vm1905, %v1821, -inf
        %v2313 = vrot.slane %v2312, 4
        %v2314 = vmax.f32 %v2312, %v2313
        %v2315 = vrot.slane %v2314, 2
        %v2316 = vmax.f32 %v2314, %v2315
        %v2317 = vrot.slane %v2316, 1
        %v2318 = vmax.f32 %v2316, %v2317
        %v2319 = vsel %vm1905, %v1823, -inf
        %v2320 = vrot.slane %v2319, 4
        %v2321 = vmax.f32 %v2319, %v2320
        %v2322 = vrot.slane %v2321, 2
        %v2323 = vmax.f32 %v2321, %v2322
        %v2324 = vrot.slane %v2323, 1
        %v2325 = vmax.f32 %v2323, %v2324
        %v2326 = vsel %vm1905, %v1831, -inf
        %v2327 = vrot.slane %v2326, 4
        %v2328 = vmax.f32 %v2326, %v2327
        %v2329 = vrot.slane %v2328, 2
        %v2330 = vmax.f32 %v2328, %v2329
        %v2331 = vrot.slane %v2330, 1
        %v2332 = vmax.f32 %v2330, %v2331
        %v2333 = vsel %vm1905, %v1839, -inf
        %v2334 = vrot.slane %v2333, 4
        %v2335 = vmax.f32 %v2333, %v2334
        %v2336 = vrot.slane %v2335, 2
        %v2337 = vmax.f32 %v2335, %v2336
        %v2338 = vrot.slane %v2337, 1
        %v2339 = vmax.f32 %v2337, %v2338
        %v2340 = vsel %vm1905, %v1838, -inf
        %v2341 = vrot.slane %v2340, 4
        %v2342 = vmax.f32 %v2340, %v2341
        %v2343 = vrot.slane %v2342, 2
        %v2344 = vmax.f32 %v2342, %v2343
        %v2345 = vrot.slane %v2344, 1
        %v2346 = vmax.f32 %v2344, %v2345
        %v2347 = vsel %vm1905, %v1840, -inf
        %v2348 = vrot.slane %v2347, 4
        %v2349 = vmax.f32 %v2347, %v2348
        %v2350 = vrot.slane %v2349, 2
        %v2351 = vmax.f32 %v2349, %v2350
        %v2352 = vrot.slane %v2351, 1
        %v2353 = vmax.f32 %v2351, %v2352
        %vm2418 = vcmask 1041409
        %v2419 = vsel %vm2418, %v1919, %v1912
        %vm2420 = vcmask 1042434
        %v2421 = vsel %vm2420, %v1926, %v2419
        %vm2422 = vcmask 1043459
        %v2423 = vsel %vm2422, %v1933, %v2421
        %vm2424 = vcmask 1044484
        %v2425 = vsel %vm2424, %v1940, %v2423
        %vm2426 = vcmask 1045509
        %v2427 = vsel %vm2426, %v1947, %v2425
        %vm2428 = vcmask 1046534
        %v2429 = vsel %vm2428, %v1954, %v2427
        %vm2430 = vcmask 1047559
        %v2431 = vsel %vm2430, %v1961, %v2429
        %v2432 = vsel %vm2418, %v1975, %v1968
        %v2433 = vsel %vm2420, %v1982, %v2432
        %v2434 = vsel %vm2422, %v1989, %v2433
        %v2435 = vsel %vm2424, %v1996, %v2434
        %v2436 = vsel %vm2426, %v2003, %v2435
        %v2437 = vsel %vm2428, %v2010, %v2436
        %v2438 = vsel %vm2430, %v2017, %v2437
        %v2439 = vsel %vm2418, %v2031, %v2024
        %v2440 = vsel %vm2420, %v2038, %v2439
        %v2441 = vsel %vm2422, %v2045, %v2440
        %v2442 = vsel %vm2424, %v2052, %v2441
        %v2443 = vsel %vm2426, %v2059, %v2442
        %v2444 = vsel %vm2428, %v2066, %v2443
        %v2445 = vsel %vm2430, %v2073, %v2444
        %v2446 = vsel %vm2418, %v2087, %v2080
        %v2447 = vsel %vm2420, %v2094, %v2446
        %v2448 = vsel %vm2422, %v2101, %v2447
        %v2449 = vsel %vm2424, %v2108, %v2448
        %v2450 = vsel %vm2426, %v2115, %v2449
        %v2451 = vsel %vm2428, %v2122, %v2450
        %v2452 = vsel %vm2430, %v2129, %v2451
        %v2453 = vsel %vm2418, %v2143, %v2136
        %v2454 = vsel %vm2420, %v2150, %v2453
        %v2455 = vsel %vm2422, %v2157, %v2454
        %v2456 = vsel %vm2424, %v2164, %v2455
        %v2457 = vsel %vm2426, %v2171, %v2456
        %v2458 = vsel %vm2428, %v2178, %v2457
        %v2459 = vsel %vm2430, %v2185, %v2458
        %v2460 = vsel %vm2418, %v2199, %v2192
        %v2461 = vsel %vm2420, %v2206, %v2460
        %v2462 = vsel %vm2422, %v2213, %v2461
        %v2463 = vsel %vm2424, %v2220, %v2462
        %v2464 = vsel %vm2426, %v2227, %v2463
        %v2465 = vsel %vm2428, %v2234, %v2464
        %v2466 = vsel %vm2430, %v2241, %v2465
        %v2467 = vsel %vm2418, %v2255, %v2248
        %v2468 = vsel %vm2420, %v2262, %v2467
        %v2469 = vsel %vm2422, %v2269, %v2468
        %v2470 = vsel %vm2424, %v2276, %v2469
        %v2471 = vsel %vm2426, %v2283, %v2470
        %v2472 = vsel %vm2428, %v2290, %v2471
        %v2473 = vsel %vm2430, %v2297, %v2472
        %v2474 = vsel %vm2418, %v2311, %v2304
        %v2475 = vsel %vm2420, %v2318, %v2474
        %v2476 = vsel %vm2422, %v2325, %v2475
        %v2477 = vsel %vm2424, %v2332, %v2476
        %v2478 = vsel %vm2426, %v2339, %v2477
        %v2479 = vsel %vm2428, %v2346, %v2478
        %v2480 = vsel %vm2430, %v2353, %v2479
        %2489 = vst.msk [vmem:[%s190] sm:$0xff] %vm1154, %v2431
        %2490 = vst.msk [vmem:[%s190 + $0x8] sm:$0xff] %vm1154, %v2438
        %2491 = vst.msk [vmem:[%s190 + $0x10] sm:$0xff] %vm1154, %v2445
        %2492 = vst.msk [vmem:[%s190 + $0x18] sm:$0xff] %vm1154, %v2452
        %2493 = vst.msk [vmem:[%s190 + $0x20] sm:$0xff] %vm1154, %v2459
        %2494 = vst.msk [vmem:[%s190 + $0x28] sm:$0xff] %vm1154, %v2466
        %2495 = vst.msk [vmem:[%s190 + $0x30] sm:$0xff] %vm1154, %v2473
        %2496 = vst.msk [vmem:[%s190 + $0x38] sm:$0xff] %vm1154, %v2480
        %s2497 = sand.u32 %s115, 1
        %s2498 = scalar_lea.sflag [#allocation3], %s2497
        %s2499 = sand.u32 %s115, 1
        %s2500 = smul.addr %s2499, 64
        %s2501 = scalar_lea.vmem [#allocation2], %s2500
        // Predicated region
        $region37: #{tpu_custom_call.1} parent=35 // pred_check
          %p2502 = pneg %p125
        $region38: #{tpu_custom_call.1} parent=35 // pred_check_branch
          %2504 = sbr.rel (%p2502) target = $region40
        $region39: #{tpu_custom_call.1} parent=35 // pred_region
          %s2506 = ssub.s32 1024, 1024
          %2507 = vsyncadd %s2498, %s2506
          %s2508 = smul.addr %s18, 8
          %s2509 = smul.addr %s2508, 128
          %s2510 = scalar_lea.hbm %s4, %s2509
          %s2511 = sshll.u32 %s2501, 4
          %s2512 = int_to_ptr.vmem [resolvable:$true] %s2511
          %2517 = dma.vmem_to_hbm [thread:$0]  %s2512, 1024, %s2510, %s2498, 128, 128, 8
        $region40: #{tpu_custom_call.1} parent=35 // pred_fallthru
          _
      $region36: #{tpu_custom_call.1} parent=5 // pred_fallthru
        _
      %p2518 = scmp.le.s32.totalorder 2, %s13
      // Predicated region
      $region41: #{tpu_custom_call.1} parent=5 // pred_check
        %p2519 = pneg %p2518
      $region42: #{tpu_custom_call.1} parent=5 // pred_check_branch
        %2521 = sbr.rel (%p2519) target = $region44
      $region43: #{tpu_custom_call.1} parent=5 // pred_region
        %s2522 = ssub.s32 %s13, 2
        // Predicated region
        $region45: #{tpu_custom_call.1} parent=43 // pred_check
          %p2523 = pneg %p131
        $region46: #{tpu_custom_call.1} parent=43 // pred_check_branch
          %2525 = sbr.rel (%p2523) target = $region48
        $region47: #{tpu_custom_call.1} parent=43 // pred_region
          %s2526 = sand.u32 %s116, 1
          %s2527 = scalar_lea.sflag [#allocation3], %s2526
          %s2528 = sand.u32 %s116, 1
          %s2529 = smul.addr %s2528, 64
          %s2530 = scalar_lea.vmem [#allocation2], %s2529
          %2531 = dma.done %s2527, 1024
        $region48: #{tpu_custom_call.1} parent=43 // pred_fallthru
          _
      $region44: #{tpu_custom_call.1} parent=5 // pred_fallthru
        _
    $region6: #{tpu_custom_call.1} parent=1 // loop_footer
      %s17 = sadd.s32 1, %s13
    $region7: #{tpu_custom_call.1} parent=1 // loop_footer_branch
      %12 = sbr.rel target = $region3
    $region8: #{tpu_custom_call.1} parent=1 // loop_exit
      _
    %2532 = vsyncpa [#allocation3], 1
    %s2533 = scalar_lea.sflag [#allocation3], 1
    %2534 = vsyncpa %s2533, 1

</llo_original>
